<compile_context>
chip_gen: v6e
topology: v6e:2x2x1
jax: 0.10.0
libtpu: 0.0.40
codegen_flags: <defaults>
</compile_context>

<pallas_src>
import jax
import jax.numpy as jnp
import numpy as np
from jax.experimental import pallas as pl
from jax.experimental.pallas import tpu as pltpu

IN_DIM = 16          # in_dim  (also the sequence length, forced by the module)
OUT_DIM = 8          # out_dim (bottleneck channels)
DOWN_FACTOR = 4      # down_sample_factor (kernel_size == stride)
BATCH = 2

T_DIM = IN_DIM // DOWN_FACTOR          # 4  conv output length
BN = BATCH * IN_DIM                    # 32 rows of the activation slab (b, channel)
BO = BATCH * OUT_DIM                   # 16 rows of the bottleneck slab (b, out-channel)

# ---- constant-slab layout (shared by packer and kernel) ----
W_ROWS, W_COLS = BO + BN, 128          # bf16 weight slab (48, 128)
C_AUX1 = DOWN_FACTOR * BO              # 64: column where w1t / s_all live
C_AUX2 = C_AUX1 + IN_DIM               # 80: column where w2t / sc live
B_ROWS, B_COLS = BN, 32                # f32 bias/mask slab (32, 32)
COL_BD = IN_DIM                        # 16: Conv1d bias column
COL_BU = IN_DIM + 1                    # 17: ConvTranspose1d bias column
ROW_MASK = 4                           # phase masks occupy rows 4..7

_SQRT_HALF = 0.7071067811865476


def _erf(x):
    # Rational approximation of erf (Abramowitz & Stegun 7.1.26, |err| < 1.5e-7),
    # built only from exp + elementwise ops so it is guaranteed to lower in Mosaic.
    # Exact divide (VPU) per correctness feedback; no approx reciprocal.
    # TODO(synk): if lax.erf gains a Pallas-TPU lowering, swap it in for exact parity.
    a1, a2, a3, a4, a5 = 0.254829592, -0.284496736, 1.421413741, -1.453152027, 1.061405429
    p = 0.3275911
    z = jnp.abs(x)
    t = 1.0 / (1.0 + p * z)
    poly = ((((a5 * t + a4) * t + a3) * t + a2) * t + a1) * t
    y = 1.0 - poly * jnp.exp(-z * z)
    return jnp.where(x >= 0, y, -y)


def _gelu(x):
    # PyTorch nn.GELU() default (exact / erf formulation).
    return 0.5 * x * (1.0 + _erf(x * _SQRT_HALF))


def unet_kernel(x_ref, w_ref, b_ref, o_ref):
    f32, bf16 = jnp.float32, jnp.bfloat16
    D, O, f, T = IN_DIM, OUT_DIM, DOWN_FACTOR, T_DIM

    x = x_ref[...]                                           # (B*N, D) f32

    # ---- input LayerNorm (eps = 1e-5); affine + b1 folded into w1t/b1 on host ----
    mu = jnp.mean(x, axis=-1, keepdims=True)
    var = jnp.mean((x - mu) ** 2, axis=-1, keepdims=True)
    xn = (x - mu) * jax.lax.rsqrt(var + 1e-5)

    # ---- linear1 (+ folded LN affine) + GELU ----
    w1t = w_ref[BO:BO + D, C_AUX1:C_AUX1 + D]                # (D, D) bf16
    h = jnp.dot(xn.astype(bf16), w1t, preferred_element_type=f32) + b_ref[0:1, 0:D]
    h = _gelu(h)                                             # (B*N, D) f32; skip branch

    # ---- down_sample: Conv1d(N -> O, kernel = stride = f) ----
    # Permute h's columns (t,k) -> (k,t) so each kernel tap k becomes a
    # contiguous lane slice, then f tiny block-diag channel-mix matmuls.
    s_all = w_ref[BO + D:BO + 2 * D, C_AUX1:C_AUX1 + D]      # (D, D) 0/1 permutation
    hS = jnp.dot(h.astype(bf16), s_all, preferred_element_type=f32).astype(bf16)
    down = b_ref[0:BO, COL_BD:COL_BD + 1]                    # bd column (B*O, 1)
    for k in range(f):
        wd_k = w_ref[0:BO, BN * k:BN * (k + 1)]              # (B*O, B*N) bf16
        down = down + jnp.dot(wd_k, hS[:, T * k:T * (k + 1)],
                              preferred_element_type=f32)    # (B*O, T)

    # ---- internal_func (instantiated as GELU) ----
    # TODO(synk): internal_func is a constructor argument of the module; GELU is used here.
    da = _gelu(down)                                         # (B*O, T) f32

    # ---- up_sample: ConvTranspose1d(O -> N, kernel = stride = f) ----
    sc = w_ref[BO + D:BO + D + T, C_AUX2:C_AUX2 + D]         # (T, D) 0/1 group-broadcast
    dsc = jnp.dot(da.astype(bf16), sc, preferred_element_type=f32)   # (B*O, D), exact dup
    up = b_ref[0:BN, COL_BU:COL_BU + 1]                      # bu column (B*N, 1)
    for k in range(f):
        mk = b_ref[ROW_MASK + k:ROW_MASK + k + 1, 0:D]       # (1, D) mask: p % f == k
        wu_k = w_ref[BO:BO + BN, BO * k:BO * (k + 1)]        # (B*N, B*O) bf16
        up = up + jnp.dot(wu_k, (dsc * mk).astype(bf16),
                          preferred_element_type=f32)        # (B*N, D)

    # ---- skip connection, linear2 + GELU ----
    y = h + up
    w2t = w_ref[BO:BO + D, C_AUX2:C_AUX2 + D]                # (D, D) bf16
    y = jnp.dot(y.astype(bf16), w2t, preferred_element_type=f32) + b_ref[1:2, 0:D]
    o_ref[...] = _gelu(y)


def init_params(key):
    D, O, f = IN_DIM, OUT_DIM, DOWN_FACTOR
    ks = jax.random.split(key, 8)

    def u(k, shape, bound):
        return jax.random.uniform(k, shape, jnp.float32, -bound, bound)

    lin_b = 1.0 / np.sqrt(D)
    dcv_b = 1.0 / np.sqrt(D * f)
    ucv_b = 1.0 / np.sqrt(O * f)
    return dict(
        ln_w=jnp.ones((D,), jnp.float32),
        ln_b=jnp.zeros((D,), jnp.float32),
        w1=u(ks[0], (D, D), lin_b), b1=u(ks[1], (D,), lin_b),
        wd=u(ks[2], (O, D, f), dcv_b), bd=u(ks[3], (O,), dcv_b),   # Conv1d weight (out, in, k)
        wu=u(ks[4], (O, D, f), ucv_b), bu=u(ks[5], (D,), ucv_b),   # ConvTranspose1d weight (in, out, k)
        w2=u(ks[6], (D, D), lin_b), b2=u(ks[7], (D,), lin_b),
    )


def _pack_operands(p):
    """Pack all constants into one bf16 weight slab and one f32 bias/mask slab."""
    D, O, f, T, B = IN_DIM, OUT_DIM, DOWN_FACTOR, T_DIM, BATCH
    f32 = jnp.float32

    # Fold LayerNorm affine into linear1:  (g*xn + b) @ W1^T + b1
    #   = xn @ (g[:,None] * W1^T) + (b @ W1^T + b1)
    w1t_eff = p['ln_w'][:, None] * p['w1'].T                 # (D, D)
    b1_eff = p['b1'] + p['ln_b'] @ p['w1'].T                 # (D,)

    # 0/1 selection matrices (exact in bf16).
    pos = np.arange(D)
    s_all = np.zeros((D, D), np.float32)                     # columns (t,k) -> (k,t)
    s_all[pos, (pos % f) * T + pos // f] = 1.0
    sc = (pos[None, :] // f == np.arange(T)[:, None]).astype(np.float32)      # (T, D)
    phase = (pos[None, :] % f == np.arange(f)[:, None]).astype(np.float32)    # (f, D)

    eye_b = jnp.eye(B, dtype=f32)
    wslab = jnp.zeros((W_ROWS, W_COLS), f32)
    for k in range(f):
        wd_k = jnp.kron(eye_b, p['wd'][:, :, k])             # (B*O, B*N) block-diag
        wu_k = jnp.kron(eye_b, p['wu'][:, :, k].T)           # (B*N, B*O) block-diag
        wslab = wslab.at[0:BO, BN * k:BN * (k + 1)].set(wd_k)
        wslab = wslab.at[BO:BO + BN, BO * k:BO * (k + 1)].set(wu_k)
    wslab = wslab.at[BO:BO + D, C_AUX1:C_AUX1 + D].set(w1t_eff)
    wslab = wslab.at[BO + D:BO + 2 * D, C_AUX1:C_AUX1 + D].set(jnp.asarray(s_all))
    wslab = wslab.at[BO:BO + D, C_AUX2:C_AUX2 + D].set(p['w2'].T)
    wslab = wslab.at[BO + D:BO + D + T, C_AUX2:C_AUX2 + D].set(jnp.asarray(sc))
    wslab = wslab.astype(jnp.bfloat16)

    bslab = jnp.zeros((B_ROWS, B_COLS), f32)
    bslab = bslab.at[0, 0:D].set(b1_eff)
    bslab = bslab.at[1, 0:D].set(p['b2'])
    bslab = bslab.at[ROW_MASK:ROW_MASK + f, 0:D].set(jnp.asarray(phase))
    bslab = bslab.at[0:BO, COL_BD].set(jnp.tile(p['bd'], B))
    bslab = bslab.at[0:BN, COL_BU].set(jnp.tile(p['bu'], B))
    return wslab, bslab


def unet_forward(x, p):
    B, N, D = x.shape
    wslab, bslab = _pack_operands(p)
    x_flat = x.reshape(B * N, D)

    vmem = pl.BlockSpec(memory_space=pltpu.MemorySpace.VMEM)
    out_flat = pl.pallas_call(
        unet_kernel,
        out_shape=jax.ShapeDtypeStruct((B * N, D), jnp.float32),
        in_specs=[vmem, vmem, vmem],       # x, bf16 weight slab, f32 bias/mask slab
        out_specs=vmem,
    )(x_flat, wslab, bslab)
    return out_flat.reshape(B, N, D)


def unet_reference(x, p, f=DOWN_FACTOR):
    """Pure-JAX f32 reference mirroring the PyTorch forward (for sanity check)."""
    B, N, D = x.shape
    T = D // f
    mu = x.mean(-1, keepdims=True)
    var = ((x - mu) ** 2).mean(-1, keepdims=True)
    xn = (x - mu) / jnp.sqrt(var + 1e-5) * p['ln_w'] + p['ln_b']
    h = _gelu(xn @ p['w1'].T + p['b1'])
    skip = h
    # Conv1d, stride == kernel == f
    down = jnp.einsum('bctf,ocf->bot', h.reshape(B, N, T, f), p['wd']) + p['bd'][None, :, None]
    da = _gelu(down)
    # ConvTranspose1d, stride == kernel == f
    up = jnp.einsum('bot,onf->bntf', da, p['wu']).reshape(B, N, T * f) + p['bu'][None, :, None]
    y = skip + up
    return _gelu(y @ p['w2'].T + p['b2'])


if __name__ == "__main__":
    key = jax.random.PRNGKey(0)
    kx, kp = jax.random.split(key)
    x = jax.random.normal(kx, (BATCH, IN_DIM, IN_DIM), jnp.float32)
    params = init_params(kp)

    out = unet_forward(x, params)
    out = jax.block_until_ready(out)

    ref = unet_reference(x, params)
    assert out.shape == (BATCH, IN_DIM, IN_DIM)
    # Remaining error is only the standard bf16 quantization of matmul operands
    # (f32 accumulation, exact erf divide), so the tolerance is tightened vs. 5e-2.
    np.testing.assert_allclose(np.asarray(out), np.asarray(ref), atol=3e-2, rtol=3e-2)
    print("KERNEL_OK")
</pallas_src>

<mosaic_0001>
module attributes {stable_mosaic.version = 11 : i64} {
  func.func @unet_kernel(%arg0: memref<32x16xf32, #tpu.memory_space<vmem>>, %arg1: memref<48x128xbf16, #tpu.memory_space<vmem>>, %arg2: memref<32x32xf32, #tpu.memory_space<vmem>>, %arg3: memref<32x16xf32, #tpu.memory_space<vmem>>) attributes {dimension_semantics = [], scalar_prefetch = 0 : i64, scratch_operands = 0 : i64, tpu.core_type = #tpu.core_type<tc>} {
    %c0 = arith.constant 0 : index
    %c0_0 = arith.constant 0 : index
    %0 = vector.load %arg0[%c0, %c0_0] : memref<32x16xf32, #tpu.memory_space<vmem>>, vector<32x16xf32>
    %cst = arith.constant dense<0.000000e+00> : vector<32xf32>
    %1 = vector.multi_reduction <add>, %0, %cst [1] : vector<32x16xf32> to vector<32xf32>
    %2 = vector.shape_cast %1 : vector<32xf32> to vector<32x1xf32>
    %cst_1 = arith.constant 1.600000e+01 : f32
    %3 = vector.broadcast %cst_1 : f32 to vector<32x1xf32>
    %4 = arith.divf %2, %3 : vector<32x1xf32>
    %5 = vector.broadcast %4 : vector<32x1xf32> to vector<32x16xf32>
    %6 = arith.subf %0, %5 : vector<32x16xf32>
    %7 = arith.mulf %6, %6 : vector<32x16xf32>
    %cst_2 = arith.constant dense<0.000000e+00> : vector<32xf32>
    %8 = vector.multi_reduction <add>, %7, %cst_2 [1] : vector<32x16xf32> to vector<32xf32>
    %9 = vector.shape_cast %8 : vector<32xf32> to vector<32x1xf32>
    %cst_3 = arith.constant 1.600000e+01 : f32
    %10 = vector.broadcast %cst_3 : f32 to vector<32x1xf32>
    %11 = arith.divf %9, %10 : vector<32x1xf32>
    %12 = vector.broadcast %4 : vector<32x1xf32> to vector<32x16xf32>
    %13 = arith.subf %0, %12 : vector<32x16xf32>
    %cst_4 = arith.constant 9.99999974E-6 : f32
    %14 = vector.broadcast %cst_4 : f32 to vector<32x1xf32>
    %15 = arith.addf %11, %14 : vector<32x1xf32>
    %16 = math.rsqrt %15 : vector<32x1xf32>
    %17 = vector.broadcast %16 : vector<32x1xf32> to vector<32x16xf32>
    %18 = arith.mulf %13, %17 : vector<32x16xf32>
    %c16 = arith.constant 16 : index
    %c64 = arith.constant 64 : index
    %19 = vector.load %arg1[%c16, %c64] : memref<48x128xbf16, #tpu.memory_space<vmem>>, vector<16x16xbf16>
    %20 = arith.truncf %18 : vector<32x16xf32> to vector<32x16xbf16>
    %cst_5 = arith.constant dense<0.000000e+00> : vector<32x16xf32>
    %21 = tpu.matmul %20, %19, %cst_5 {dimension_numbers = #tpu.dot_dimension_numbers<[1], [0], [0], [1], [0, 0, 1, 1], [], []>} : vector<32x16xbf16>, vector<16x16xbf16>, vector<32x16xf32> -> vector<32x16xf32>
    %c0_6 = arith.constant 0 : index
    %c0_7 = arith.constant 0 : index
    %22 = vector.load %arg2[%c0_6, %c0_7] : memref<32x32xf32, #tpu.memory_space<vmem>>, vector<1x16xf32>
    %23 = vector.broadcast %22 : vector<1x16xf32> to vector<32x16xf32>
    %24 = arith.addf %21, %23 : vector<32x16xf32>
    %cst_8 = arith.constant 5.000000e-01 : f32
    %25 = vector.broadcast %cst_8 : f32 to vector<32x16xf32>
    %26 = arith.mulf %25, %24 : vector<32x16xf32>
    %cst_9 = arith.constant 0.707106769 : f32
    %27 = vector.broadcast %cst_9 : f32 to vector<32x16xf32>
    %28 = arith.mulf %24, %27 : vector<32x16xf32>
    %29 = math.absf %28 : vector<32x16xf32>
    %cst_10 = arith.constant 0.327591091 : f32
    %30 = vector.broadcast %cst_10 : f32 to vector<32x16xf32>
    %31 = arith.mulf %30, %29 : vector<32x16xf32>
    %cst_11 = arith.constant 1.000000e+00 : f32
    %32 = vector.broadcast %cst_11 : f32 to vector<32x16xf32>
    %33 = arith.addf %32, %31 : vector<32x16xf32>
    %cst_12 = arith.constant 1.000000e+00 : f32
    %34 = vector.broadcast %cst_12 : f32 to vector<32x16xf32>
    %35 = arith.divf %34, %33 : vector<32x16xf32>
    %cst_13 = arith.constant 1.06140542 : f32
    %36 = vector.broadcast %cst_13 : f32 to vector<32x16xf32>
    %37 = arith.mulf %36, %35 : vector<32x16xf32>
    %cst_14 = arith.constant -1.45315206 : f32
    %38 = vector.broadcast %cst_14 : f32 to vector<32x16xf32>
    %39 = arith.addf %37, %38 : vector<32x16xf32>
    %40 = arith.mulf %39, %35 : vector<32x16xf32>
    %cst_15 = arith.constant 1.42141378 : f32
    %41 = vector.broadcast %cst_15 : f32 to vector<32x16xf32>
    %42 = arith.addf %40, %41 : vector<32x16xf32>
    %43 = arith.mulf %42, %35 : vector<32x16xf32>
    %cst_16 = arith.constant -0.284496725 : f32
    %44 = vector.broadcast %cst_16 : f32 to vector<32x16xf32>
    %45 = arith.addf %43, %44 : vector<32x16xf32>
    %46 = arith.mulf %45, %35 : vector<32x16xf32>
    %cst_17 = arith.constant 0.254829586 : f32
    %47 = vector.broadcast %cst_17 : f32 to vector<32x16xf32>
    %48 = arith.addf %46, %47 : vector<32x16xf32>
    %49 = arith.mulf %48, %35 : vector<32x16xf32>
    %cst_18 = arith.constant 0.000000e+00 : f32
    %50 = vector.broadcast %cst_18 : f32 to vector<32x16xf32>
    %51 = arith.subf %50, %29 : vector<32x16xf32>
    %52 = arith.mulf %51, %29 : vector<32x16xf32>
    %53 = math.exp %52 : vector<32x16xf32>
    %54 = arith.mulf %49, %53 : vector<32x16xf32>
    %cst_19 = arith.constant 1.000000e+00 : f32
    %55 = vector.broadcast %cst_19 : f32 to vector<32x16xf32>
    %56 = arith.subf %55, %54 : vector<32x16xf32>
    %cst_20 = arith.constant 0.000000e+00 : f32
    %57 = vector.broadcast %cst_20 : f32 to vector<32x16xf32>
    %58 = arith.cmpf oge, %28, %57 : vector<32x16xf32>
    %cst_21 = arith.constant 0.000000e+00 : f32
    %59 = vector.broadcast %cst_21 : f32 to vector<32x16xf32>
    %60 = arith.subf %59, %56 : vector<32x16xf32>
    %61 = arith.select %58, %56, %60 : vector<32x16xi1>, vector<32x16xf32>
    %cst_22 = arith.constant 1.000000e+00 : f32
    %62 = vector.broadcast %cst_22 : f32 to vector<32x16xf32>
    %63 = arith.addf %62, %61 : vector<32x16xf32>
    %64 = arith.mulf %26, %63 : vector<32x16xf32>
    %c32 = arith.constant 32 : index
    %c64_23 = arith.constant 64 : index
    %65 = vector.load %arg1[%c32, %c64_23] : memref<48x128xbf16, #tpu.memory_space<vmem>>, vector<16x16xbf16>
    %66 = arith.truncf %64 : vector<32x16xf32> to vector<32x16xbf16>
    %cst_24 = arith.constant dense<0.000000e+00> : vector<32x16xf32>
    %67 = tpu.matmul %66, %65, %cst_24 {dimension_numbers = #tpu.dot_dimension_numbers<[1], [0], [0], [1], [0, 0, 1, 1], [], []>} : vector<32x16xbf16>, vector<16x16xbf16>, vector<32x16xf32> -> vector<32x16xf32>
    %68 = arith.truncf %67 : vector<32x16xf32> to vector<32x16xbf16>
    %c0_25 = arith.constant 0 : index
    %c16_26 = arith.constant 16 : index
    %69 = vector.load %arg2[%c0_25, %c16_26] : memref<32x32xf32, #tpu.memory_space<vmem>>, vector<16x1xf32>
    %c0_27 = arith.constant 0 : index
    %c0_28 = arith.constant 0 : index
    %70 = vector.load %arg1[%c0_27, %c0_28] : memref<48x128xbf16, #tpu.memory_space<vmem>>, vector<16x32xbf16>
    %71 = vector.extract_strided_slice %68 {offsets = [0, 0], sizes = [32, 4], strides = [1, 1]} : vector<32x16xbf16> to vector<32x4xbf16>
    %cst_29 = arith.constant dense<0.000000e+00> : vector<16x4xf32>
    %72 = tpu.matmul %70, %71, %cst_29 {dimension_numbers = #tpu.dot_dimension_numbers<[1], [0], [0], [1], [0, 0, 1, 1], [], []>} : vector<16x32xbf16>, vector<32x4xbf16>, vector<16x4xf32> -> vector<16x4xf32>
    %73 = vector.broadcast %69 : vector<16x1xf32> to vector<16x4xf32>
    %74 = arith.addf %73, %72 : vector<16x4xf32>
    %c0_30 = arith.constant 0 : index
    %c32_31 = arith.constant 32 : index
    %75 = vector.load %arg1[%c0_30, %c32_31] : memref<48x128xbf16, #tpu.memory_space<vmem>>, vector<16x32xbf16>
    %76 = vector.extract_strided_slice %68 {offsets = [0, 4], sizes = [32, 4], strides = [1, 1]} : vector<32x16xbf16> to vector<32x4xbf16>
    %cst_32 = arith.constant dense<0.000000e+00> : vector<16x4xf32>
    %77 = tpu.matmul %75, %76, %cst_32 {dimension_numbers = #tpu.dot_dimension_numbers<[1], [0], [0], [1], [0, 0, 1, 1], [], []>} : vector<16x32xbf16>, vector<32x4xbf16>, vector<16x4xf32> -> vector<16x4xf32>
    %78 = arith.addf %74, %77 : vector<16x4xf32>
    %c0_33 = arith.constant 0 : index
    %c64_34 = arith.constant 64 : index
    %79 = vector.load %arg1[%c0_33, %c64_34] : memref<48x128xbf16, #tpu.memory_space<vmem>>, vector<16x32xbf16>
    %80 = vector.extract_strided_slice %68 {offsets = [0, 8], sizes = [32, 4], strides = [1, 1]} : vector<32x16xbf16> to vector<32x4xbf16>
    %cst_35 = arith.constant dense<0.000000e+00> : vector<16x4xf32>
    %81 = tpu.matmul %79, %80, %cst_35 {dimension_numbers = #tpu.dot_dimension_numbers<[1], [0], [0], [1], [0, 0, 1, 1], [], []>} : vector<16x32xbf16>, vector<32x4xbf16>, vector<16x4xf32> -> vector<16x4xf32>
    %82 = arith.addf %78, %81 : vector<16x4xf32>
    %c0_36 = arith.constant 0 : index
    %c96 = arith.constant 96 : index
    %83 = vector.load %arg1[%c0_36, %c96] : memref<48x128xbf16, #tpu.memory_space<vmem>>, vector<16x32xbf16>
    %84 = vector.extract_strided_slice %68 {offsets = [0, 12], sizes = [32, 4], strides = [1, 1]} : vector<32x16xbf16> to vector<32x4xbf16>
    %cst_37 = arith.constant dense<0.000000e+00> : vector<16x4xf32>
    %85 = tpu.matmul %83, %84, %cst_37 {dimension_numbers = #tpu.dot_dimension_numbers<[1], [0], [0], [1], [0, 0, 1, 1], [], []>} : vector<16x32xbf16>, vector<32x4xbf16>, vector<16x4xf32> -> vector<16x4xf32>
    %86 = arith.addf %82, %85 : vector<16x4xf32>
    %cst_38 = arith.constant 5.000000e-01 : f32
    %87 = vector.broadcast %cst_38 : f32 to vector<16x4xf32>
    %88 = arith.mulf %87, %86 : vector<16x4xf32>
    %cst_39 = arith.constant 0.707106769 : f32
    %89 = vector.broadcast %cst_39 : f32 to vector<16x4xf32>
    %90 = arith.mulf %86, %89 : vector<16x4xf32>
    %91 = math.absf %90 : vector<16x4xf32>
    %cst_40 = arith.constant 0.327591091 : f32
    %92 = vector.broadcast %cst_40 : f32 to vector<16x4xf32>
    %93 = arith.mulf %92, %91 : vector<16x4xf32>
    %cst_41 = arith.constant 1.000000e+00 : f32
    %94 = vector.broadcast %cst_41 : f32 to vector<16x4xf32>
    %95 = arith.addf %94, %93 : vector<16x4xf32>
    %cst_42 = arith.constant 1.000000e+00 : f32
    %96 = vector.broadcast %cst_42 : f32 to vector<16x4xf32>
    %97 = arith.divf %96, %95 : vector<16x4xf32>
    %cst_43 = arith.constant 1.06140542 : f32
    %98 = vector.broadcast %cst_43 : f32 to vector<16x4xf32>
    %99 = arith.mulf %98, %97 : vector<16x4xf32>
    %cst_44 = arith.constant -1.45315206 : f32
    %100 = vector.broadcast %cst_44 : f32 to vector<16x4xf32>
    %101 = arith.addf %99, %100 : vector<16x4xf32>
    %102 = arith.mulf %101, %97 : vector<16x4xf32>
    %cst_45 = arith.constant 1.42141378 : f32
    %103 = vector.broadcast %cst_45 : f32 to vector<16x4xf32>
    %104 = arith.addf %102, %103 : vector<16x4xf32>
    %105 = arith.mulf %104, %97 : vector<16x4xf32>
    %cst_46 = arith.constant -0.284496725 : f32
    %106 = vector.broadcast %cst_46 : f32 to vector<16x4xf32>
    %107 = arith.addf %105, %106 : vector<16x4xf32>
    %108 = arith.mulf %107, %97 : vector<16x4xf32>
    %cst_47 = arith.constant 0.254829586 : f32
    %109 = vector.broadcast %cst_47 : f32 to vector<16x4xf32>
    %110 = arith.addf %108, %109 : vector<16x4xf32>
    %111 = arith.mulf %110, %97 : vector<16x4xf32>
    %cst_48 = arith.constant 0.000000e+00 : f32
    %112 = vector.broadcast %cst_48 : f32 to vector<16x4xf32>
    %113 = arith.subf %112, %91 : vector<16x4xf32>
    %114 = arith.mulf %113, %91 : vector<16x4xf32>
    %115 = math.exp %114 : vector<16x4xf32>
    %116 = arith.mulf %111, %115 : vector<16x4xf32>
    %cst_49 = arith.constant 1.000000e+00 : f32
    %117 = vector.broadcast %cst_49 : f32 to vector<16x4xf32>
    %118 = arith.subf %117, %116 : vector<16x4xf32>
    %cst_50 = arith.constant 0.000000e+00 : f32
    %119 = vector.broadcast %cst_50 : f32 to vector<16x4xf32>
    %120 = arith.cmpf oge, %90, %119 : vector<16x4xf32>
    %cst_51 = arith.constant 0.000000e+00 : f32
    %121 = vector.broadcast %cst_51 : f32 to vector<16x4xf32>
    %122 = arith.subf %121, %118 : vector<16x4xf32>
    %123 = arith.select %120, %118, %122 : vector<16x4xi1>, vector<16x4xf32>
    %cst_52 = arith.constant 1.000000e+00 : f32
    %124 = vector.broadcast %cst_52 : f32 to vector<16x4xf32>
    %125 = arith.addf %124, %123 : vector<16x4xf32>
    %126 = arith.mulf %88, %125 : vector<16x4xf32>
    %c32_53 = arith.constant 32 : index
    %c80 = arith.constant 80 : index
    %127 = vector.load %arg1[%c32_53, %c80] : memref<48x128xbf16, #tpu.memory_space<vmem>>, vector<4x16xbf16>
    %128 = arith.truncf %126 : vector<16x4xf32> to vector<16x4xbf16>
    %cst_54 = arith.constant dense<0.000000e+00> : vector<16x16xf32>
    %129 = tpu.matmul %128, %127, %cst_54 {dimension_numbers = #tpu.dot_dimension_numbers<[1], [0], [0], [1], [0, 0, 1, 1], [], []>} : vector<16x4xbf16>, vector<4x16xbf16>, vector<16x16xf32> -> vector<16x16xf32>
    %c0_55 = arith.constant 0 : index
    %c17 = arith.constant 17 : index
    %130 = vector.load %arg2[%c0_55, %c17] : memref<32x32xf32, #tpu.memory_space<vmem>>, vector<32x1xf32>
    %c4 = arith.constant 4 : index
    %c0_56 = arith.constant 0 : index
    %131 = vector.load %arg2[%c4, %c0_56] : memref<32x32xf32, #tpu.memory_space<vmem>>, vector<1x16xf32>
    %c16_57 = arith.constant 16 : index
    %c0_58 = arith.constant 0 : index
    %132 = vector.load %arg1[%c16_57, %c0_58] : memref<48x128xbf16, #tpu.memory_space<vmem>>, vector<32x16xbf16>
    %133 = vector.broadcast %131 : vector<1x16xf32> to vector<16x16xf32>
    %134 = arith.mulf %129, %133 : vector<16x16xf32>
    %135 = arith.truncf %134 : vector<16x16xf32> to vector<16x16xbf16>
    %cst_59 = arith.constant dense<0.000000e+00> : vector<32x16xf32>
    %136 = tpu.matmul %132, %135, %cst_59 {dimension_numbers = #tpu.dot_dimension_numbers<[1], [0], [0], [1], [0, 0, 1, 1], [], []>} : vector<32x16xbf16>, vector<16x16xbf16>, vector<32x16xf32> -> vector<32x16xf32>
    %137 = vector.broadcast %130 : vector<32x1xf32> to vector<32x16xf32>
    %138 = arith.addf %137, %136 : vector<32x16xf32>
    %c5 = arith.constant 5 : index
    %c0_60 = arith.constant 0 : index
    %139 = vector.load %arg2[%c5, %c0_60] : memref<32x32xf32, #tpu.memory_space<vmem>>, vector<1x16xf32>
    %c16_61 = arith.constant 16 : index
    %c16_62 = arith.constant 16 : index
    %140 = vector.load %arg1[%c16_61, %c16_62] : memref<48x128xbf16, #tpu.memory_space<vmem>>, vector<32x16xbf16>
    %141 = vector.broadcast %139 : vector<1x16xf32> to vector<16x16xf32>
    %142 = arith.mulf %129, %141 : vector<16x16xf32>
    %143 = arith.truncf %142 : vector<16x16xf32> to vector<16x16xbf16>
    %cst_63 = arith.constant dense<0.000000e+00> : vector<32x16xf32>
    %144 = tpu.matmul %140, %143, %cst_63 {dimension_numbers = #tpu.dot_dimension_numbers<[1], [0], [0], [1], [0, 0, 1, 1], [], []>} : vector<32x16xbf16>, vector<16x16xbf16>, vector<32x16xf32> -> vector<32x16xf32>
    %145 = arith.addf %138, %144 : vector<32x16xf32>
    %c6 = arith.constant 6 : index
    %c0_64 = arith.constant 0 : index
    %146 = vector.load %arg2[%c6, %c0_64] : memref<32x32xf32, #tpu.memory_space<vmem>>, vector<1x16xf32>
    %c16_65 = arith.constant 16 : index
    %c32_66 = arith.constant 32 : index
    %147 = vector.load %arg1[%c16_65, %c32_66] : memref<48x128xbf16, #tpu.memory_space<vmem>>, vector<32x16xbf16>
    %148 = vector.broadcast %146 : vector<1x16xf32> to vector<16x16xf32>
    %149 = arith.mulf %129, %148 : vector<16x16xf32>
    %150 = arith.truncf %149 : vector<16x16xf32> to vector<16x16xbf16>
    %cst_67 = arith.constant dense<0.000000e+00> : vector<32x16xf32>
    %151 = tpu.matmul %147, %150, %cst_67 {dimension_numbers = #tpu.dot_dimension_numbers<[1], [0], [0], [1], [0, 0, 1, 1], [], []>} : vector<32x16xbf16>, vector<16x16xbf16>, vector<32x16xf32> -> vector<32x16xf32>
    %152 = arith.addf %145, %151 : vector<32x16xf32>
    %c7 = arith.constant 7 : index
    %c0_68 = arith.constant 0 : index
    %153 = vector.load %arg2[%c7, %c0_68] : memref<32x32xf32, #tpu.memory_space<vmem>>, vector<1x16xf32>
    %c16_69 = arith.constant 16 : index
    %c48 = arith.constant 48 : index
    %154 = vector.load %arg1[%c16_69, %c48] : memref<48x128xbf16, #tpu.memory_space<vmem>>, vector<32x16xbf16>
    %155 = vector.broadcast %153 : vector<1x16xf32> to vector<16x16xf32>
    %156 = arith.mulf %129, %155 : vector<16x16xf32>
    %157 = arith.truncf %156 : vector<16x16xf32> to vector<16x16xbf16>
    %cst_70 = arith.constant dense<0.000000e+00> : vector<32x16xf32>
    %158 = tpu.matmul %154, %157, %cst_70 {dimension_numbers = #tpu.dot_dimension_numbers<[1], [0], [0], [1], [0, 0, 1, 1], [], []>} : vector<32x16xbf16>, vector<16x16xbf16>, vector<32x16xf32> -> vector<32x16xf32>
    %159 = arith.addf %152, %158 : vector<32x16xf32>
    %160 = arith.addf %64, %159 : vector<32x16xf32>
    %c16_71 = arith.constant 16 : index
    %c80_72 = arith.constant 80 : index
    %161 = vector.load %arg1[%c16_71, %c80_72] : memref<48x128xbf16, #tpu.memory_space<vmem>>, vector<16x16xbf16>
    %162 = arith.truncf %160 : vector<32x16xf32> to vector<32x16xbf16>
    %cst_73 = arith.constant dense<0.000000e+00> : vector<32x16xf32>
    %163 = tpu.matmul %162, %161, %cst_73 {dimension_numbers = #tpu.dot_dimension_numbers<[1], [0], [0], [1], [0, 0, 1, 1], [], []>} : vector<32x16xbf16>, vector<16x16xbf16>, vector<32x16xf32> -> vector<32x16xf32>
    %c1 = arith.constant 1 : index
    %c0_74 = arith.constant 0 : index
    %164 = vector.load %arg2[%c1, %c0_74] : memref<32x32xf32, #tpu.memory_space<vmem>>, vector<1x16xf32>
    %165 = vector.broadcast %164 : vector<1x16xf32> to vector<32x16xf32>
    %166 = arith.addf %163, %165 : vector<32x16xf32>
    %cst_75 = arith.constant 5.000000e-01 : f32
    %167 = vector.broadcast %cst_75 : f32 to vector<32x16xf32>
    %168 = arith.mulf %167, %166 : vector<32x16xf32>
    %cst_76 = arith.constant 0.707106769 : f32
    %169 = vector.broadcast %cst_76 : f32 to vector<32x16xf32>
    %170 = arith.mulf %166, %169 : vector<32x16xf32>
    %171 = math.absf %170 : vector<32x16xf32>
    %cst_77 = arith.constant 0.327591091 : f32
    %172 = vector.broadcast %cst_77 : f32 to vector<32x16xf32>
    %173 = arith.mulf %172, %171 : vector<32x16xf32>
    %cst_78 = arith.constant 1.000000e+00 : f32
    %174 = vector.broadcast %cst_78 : f32 to vector<32x16xf32>
    %175 = arith.addf %174, %173 : vector<32x16xf32>
    %cst_79 = arith.constant 1.000000e+00 : f32
    %176 = vector.broadcast %cst_79 : f32 to vector<32x16xf32>
    %177 = arith.divf %176, %175 : vector<32x16xf32>
    %cst_80 = arith.constant 1.06140542 : f32
    %178 = vector.broadcast %cst_80 : f32 to vector<32x16xf32>
    %179 = arith.mulf %178, %177 : vector<32x16xf32>
    %cst_81 = arith.constant -1.45315206 : f32
    %180 = vector.broadcast %cst_81 : f32 to vector<32x16xf32>
    %181 = arith.addf %179, %180 : vector<32x16xf32>
    %182 = arith.mulf %181, %177 : vector<32x16xf32>
    %cst_82 = arith.constant 1.42141378 : f32
    %183 = vector.broadcast %cst_82 : f32 to vector<32x16xf32>
    %184 = arith.addf %182, %183 : vector<32x16xf32>
    %185 = arith.mulf %184, %177 : vector<32x16xf32>
    %cst_83 = arith.constant -0.284496725 : f32
    %186 = vector.broadcast %cst_83 : f32 to vector<32x16xf32>
    %187 = arith.addf %185, %186 : vector<32x16xf32>
    %188 = arith.mulf %187, %177 : vector<32x16xf32>
    %cst_84 = arith.constant 0.254829586 : f32
    %189 = vector.broadcast %cst_84 : f32 to vector<32x16xf32>
    %190 = arith.addf %188, %189 : vector<32x16xf32>
    %191 = arith.mulf %190, %177 : vector<32x16xf32>
    %cst_85 = arith.constant 0.000000e+00 : f32
    %192 = vector.broadcast %cst_85 : f32 to vector<32x16xf32>
    %193 = arith.subf %192, %171 : vector<32x16xf32>
    %194 = arith.mulf %193, %171 : vector<32x16xf32>
    %195 = math.exp %194 : vector<32x16xf32>
    %196 = arith.mulf %191, %195 : vector<32x16xf32>
    %cst_86 = arith.constant 1.000000e+00 : f32
    %197 = vector.broadcast %cst_86 : f32 to vector<32x16xf32>
    %198 = arith.subf %197, %196 : vector<32x16xf32>
    %cst_87 = arith.constant 0.000000e+00 : f32
    %199 = vector.broadcast %cst_87 : f32 to vector<32x16xf32>
    %200 = arith.cmpf oge, %170, %199 : vector<32x16xf32>
    %cst_88 = arith.constant 0.000000e+00 : f32
    %201 = vector.broadcast %cst_88 : f32 to vector<32x16xf32>
    %202 = arith.subf %201, %198 : vector<32x16xf32>
    %203 = arith.select %200, %198, %202 : vector<32x16xi1>, vector<32x16xf32>
    %cst_89 = arith.constant 1.000000e+00 : f32
    %204 = vector.broadcast %cst_89 : f32 to vector<32x16xf32>
    %205 = arith.addf %204, %203 : vector<32x16xf32>
    %206 = arith.mulf %168, %205 : vector<32x16xf32>
    %c0_90 = arith.constant 0 : index
    %c0_91 = arith.constant 0 : index
    %207 = vector.load %arg3[%c0_90, %c0_91] : memref<32x16xf32, #tpu.memory_space<vmem>>, vector<32x16xf32>
    tpu.vector_store %arg3[%c0_90, %c0_91], %206 {strides = array<i32>} : memref<32x16xf32, #tpu.memory_space<vmem>>, vector<32x16xf32>,
    return
  }
}

</mosaic_0001>

<llo_original>
// kernel: tpu_custom_call.1
$region0: #{tpu_custom_call.1}
  #allocation0 [shape = 'u32[]', space=smem, size = 0x4, offset = 0x4, fixed_abs, tag = 'smem constant byte address 0x4 - core index']
  #allocation1 [shape = 'u32[144,128]{1,0:T(1,128)}', space=vmem, size = 0x12000, scoped, tag = 'internal scratch']
  %s0 = inlined_call_operand.vmem [shape: f32[32,16], index: 0, kind: input, shape index: {}]
  %s1 = inlined_call_operand.hbm [shape: bf16[48,128], index: 1, kind: input, shape index: {}]
  %s2 = inlined_call_operand.vmem [shape: f32[32,32], index: 2, kind: input, shape index: {}]
  %s3 = inlined_call_operand.vmem [shape: f32[32,16], index: 3, kind: output, shape index: {}]
  %s4 = sld [smem:[#allocation0]]
  $region26: #{tpu_custom_call.1} parent=0
    _
  %s6 = ssub.s32 1, %s4
  %s7 = scalar_select 0, %s6, %s4
  $region1: #{tpu_custom_call.1} parent=0
    #allocation2 [shape = 'u8[12288]{0}', space=vmem, size = 0x3000, scoped, tag = 'input window, operand 1, single buffered']
    #allocation3 [shape = 's32[1]{0}', space=sflag, size = 0x4, scoped, tag = 'scoped memory for tpu_custom_call.1']
    %8 = vsyncpa [#allocation3], 0
    // Predicated region
    $region2: #{tpu_custom_call.1} parent=1 // pred_check
      _
    $region3: #{tpu_custom_call.1} parent=1 // pred_check_branch
      %10 = sbr.rel (0) target = $region5
    $region4: #{tpu_custom_call.1} parent=1 // pred_region
      _
    $region5: #{tpu_custom_call.1} parent=1 // pred_fallthru
      _
    // Predicated region
    $region6: #{tpu_custom_call.1} parent=1 // pred_check
      _
    $region7: #{tpu_custom_call.1} parent=1 // pred_check_branch
      %12 = sbr.rel (0) target = $region9
    $region8: #{tpu_custom_call.1} parent=1 // pred_region
      %s14 = ssub.s32 384, 384
      %15 = vsyncadd [#allocation3], %s14
      %s16 = sshll.u32 [#allocation2], 4
      %s17 = int_to_ptr.vmem [resolvable:$true] %s16
      %22 = dma.hbm_to_vmem [thread:$0]  %s1, 384, %s17, [#allocation3], 64, 64, 4
    $region9: #{tpu_custom_call.1} parent=1 // pred_fallthru
      _
    // Predicated region
    $region10: #{tpu_custom_call.1} parent=1 // pred_check
      _
    $region11: #{tpu_custom_call.1} parent=1 // pred_check_branch
      %24 = sbr.rel (0) target = $region13
    $region12: #{tpu_custom_call.1} parent=1 // pred_region
      _
    $region13: #{tpu_custom_call.1} parent=1 // pred_fallthru
      _
    // Predicated region
    $region14: #{tpu_custom_call.1} parent=1 // pred_check
      _
    $region15: #{tpu_custom_call.1} parent=1 // pred_check_branch
      %26 = sbr.rel (0) target = $region17
    $region16: #{tpu_custom_call.1} parent=1 // pred_region
      %27 = dma.done [#allocation3], 384
    $region17: #{tpu_custom_call.1} parent=1 // pred_fallthru
      _
    %v29 = vld [vmem:[%s0] sm:$0xff]
    %v30 = vld [vmem:[%s0 + $0x8] sm:$0xff]
    %v31 = vld [vmem:[%s0 + $0x10] sm:$0xff]
    %v32 = vld [vmem:[%s0 + $0x18] sm:$0xff]
    %vm33 = vcmask 130048
    %v34 = vsel %vm33, %v29, 0.0
    %35 = vadd.xlane.f32.xlu0 %v34
    %v36 = vpop.xlane.xlu0 %35
    %v37 = vsel %vm33, %v30, 0.0
    %38 = vadd.xlane.f32.xlu0 %v37
    %v39 = vpop.xlane.xlu0 %38
    %v40 = vsel %vm33, %v31, 0.0
    %41 = vadd.xlane.f32.xlu0 %v40
    %v42 = vpop.xlane.xlu0 %41
    %v43 = vsel %vm33, %v32, 0.0
    %44 = vadd.xlane.f32.xlu0 %v43
    %v45 = vpop.xlane.xlu0 %44
    %v46 = vrcp.pop 16.0
    %v47 = vmul.f32 %v36, %v46
    %v48 = vmul.f32 %v39, %v46
    %v49 = vmul.f32 %v42, %v46
    %v50 = vmul.f32 %v45, %v46
    %v51 = vsub.f32 %v29, %v47
    %v52 = vsub.f32 %v30, %v48
    %v53 = vsub.f32 %v31, %v49
    %v54 = vsub.f32 %v32, %v50
    %v55 = vmul.f32 %v51, %v51
    %v56 = vmul.f32 %v52, %v52
    %v57 = vmul.f32 %v53, %v53
    %v58 = vmul.f32 %v54, %v54
    %v59 = vsel %vm33, %v55, 0.0
    %60 = vadd.xlane.f32.xlu0 %v59
    %v61 = vpop.xlane.xlu0 %60
    %v62 = vsel %vm33, %v56, 0.0
    %63 = vadd.xlane.f32.xlu0 %v62
    %v64 = vpop.xlane.xlu0 %63
    %v65 = vsel %vm33, %v57, 0.0
    %66 = vadd.xlane.f32.xlu0 %v65
    %v67 = vpop.xlane.xlu0 %66
    %v68 = vsel %vm33, %v58, 0.0
    %69 = vadd.xlane.f32.xlu0 %v68
    %v70 = vpop.xlane.xlu0 %69
    %v71 = vmul.f32 %v61, %v46
    %v72 = vmul.f32 %v64, %v46
    %v73 = vmul.f32 %v67, %v46
    %v74 = vmul.f32 %v70, %v46
    %v75 = vadd.f32 %v71, 1e-05
    %v76 = vadd.f32 %v72, 1e-05
    %v77 = vadd.f32 %v73, 1e-05
    %v78 = vadd.f32 %v74, 1e-05
    %v79 = vrsqrt.pop %v75
    %v80 = vrsqrt.pop %v76
    %v81 = vrsqrt.pop %v77
    %v82 = vrsqrt.pop %v78
    %v83 = vmul.f32 %v51, %v79
    %v84 = vmul.f32 %v52, %v80
    %v85 = vmul.f32 %v53, %v81
    %v86 = vmul.f32 %v54, %v82
    %v87 = vld [vmem:[#allocation2 + $0x8] sm:$0xf]
    %v88 = vld [vmem:[#allocation2 + $0xc] sm:$0xf]
    %v89 = vpack.c.bf16 %v84, %v83
    %v90 = vpack.c.bf16 %v86, %v85
    %v91 = vld [vmem:[%s2] sm:$0x1]
    %v92 = vlaneseq
    %v93 = vshrl.u32 %v92, 7
    %v94 = vsub.s32 0, %v93
    %v95 = vrot.slane %v91, %v94
    %v98 = vunpack.c.l.b16 %v87
    %v99 = vunpack.c.l.b16 %v88
    %v100 = vpack.c.b16 %v99, %v98
    %101 = vrot.lane.b32.xlu0 %v100, 64
    %v102 = vpop.permute.xlu0 %101
    %v105 = vsel %vm33, %v89, 0
    %v108 = vsel %vm33, %v90, 0
    %110 = vmatprep.subr.bf16.mxu0 0
    %111 = vmatpush1.bf16.msra.mxu0 0
    %112 = vmatprep.subr.bf16.mxu0 0
    %113 = vmatpush1.bf16.msra.mxu0 0
    %114 = vmatprep.subr.bf16.mxu0 0
    %115 = vmatpush1.bf16.msra.mxu0 0
    %116 = vmatprep.subr.bf16.mxu0 0
    %117 = vmatpush1.bf16.msra.mxu0 0
    %118 = vmatprep.subr.bf16.mxu0 0
    %119 = vmatpush1.bf16.msra.mxu0 0
    %120 = vmatprep.subr.bf16.mxu0 0
    %121 = vmatpush1.bf16.msra.mxu0 0
    %122 = vmatprep.subr.bf16.mxu0 0
    %123 = vmatpush1.bf16.msra.mxu0 0
    %124 = vmatprep.subr.bf16.mxu0 0
    %125 = vmatpush1.bf16.msra.mxu0 %v102
    %126 = vmatprep.subr.bf16.mxu0 0
    %127 = vmatpush2.bf16.msra.mxu0 0
    %128 = vmatprep.subr.bf16.mxu0 0
    %129 = vmatpush2.bf16.msra.mxu0 0
    %130 = vmatprep.subr.bf16.mxu0 0
    %131 = vmatpush2.bf16.msra.mxu0 0
    %132 = vmatprep.subr.bf16.mxu0 0
    %133 = vmatpush2.bf16.msra.mxu0 0
    %134 = vmatprep.subr.bf16.mxu0 0
    %135 = vmatpush2.bf16.msra.mxu0 0
    %136 = vmatprep.subr.bf16.mxu0 0
    %137 = vmatpush2.bf16.msra.mxu0 0
    %138 = vmatprep.subr.bf16.mxu0 0
    %139 = vmatpush2.bf16.msra.mxu0 0
    %140 = vmatprep.subr.bf16.mxu0 0
    %141 = vmatpush2.bf16.msra.mxu0 0
    %142 = vmatprep.mubr.bf16.mxu0 0
    %143 = vmatmul.mubr.bf16.gmra.mxu0 %v105
    %v144 = vpop.f32.mrf.mxu0
    %v145 = vadd.f32 %v95, %v144
    %v146 = vpop.f32.mrf.mxu0
    %v147 = vpop.f32.mrf.mxu0
    %v148 = vadd.f32 %v95, %v147
    %v149 = vpop.f32.mrf.mxu0
    %150 = vmatprep.mubr.bf16.mxu0 0
    %151 = vmatmul.mubr.bf16.gmra.mxu0 %v108
    %v152 = vpop.f32.mrf.mxu0
    %v153 = vadd.f32 %v95, %v152
    %v154 = vpop.f32.mrf.mxu0
    %v155 = vpop.f32.mrf.mxu0
    %v156 = vadd.f32 %v95, %v155
    %v157 = vpop.f32.mrf.mxu0
    %158 = vdwg.mxu0
    %v159 = vmul.f32 %v145, 0.5
    %v160 = vmul.f32 %v148, 0.5
    %v161 = vmul.f32 %v153, 0.5
    %v162 = vmul.f32 %v156, 0.5
    %v163 = vmul.f32 %v145, 0.70710677
    %v164 = vmul.f32 %v148, 0.70710677
    %v165 = vmul.f32 %v153, 0.70710677
    %v166 = vmul.f32 %v156, 0.70710677
    %v167 = vand.u32 2147483647, %v163
    %v168 = vand.u32 2147483647, %v164
    %v169 = vand.u32 2147483647, %v165
    %v170 = vand.u32 2147483647, %v166
    %v171 = vmul.f32 %v167, 0.3275911
    %v172 = vmul.f32 %v168, 0.3275911
    %v173 = vmul.f32 %v169, 0.3275911
    %v174 = vmul.f32 %v170, 0.3275911
    %v175 = vadd.f32 %v171, 1.0
    %v176 = vadd.f32 %v172, 1.0
    %v177 = vadd.f32 %v173, 1.0
    %v178 = vadd.f32 %v174, 1.0
    %v179 = vrcp.pop %v175
    %v180 = vmul.f32 1.0, %v179
    %v181 = vrcp.pop %v176
    %v182 = vmul.f32 1.0, %v181
    %v183 = vrcp.pop %v177
    %v184 = vmul.f32 1.0, %v183
    %v185 = vrcp.pop %v178
    %v186 = vmul.f32 1.0, %v185
    %v187 = vmul.f32 %v180, 1.0614054
    %v188 = vmul.f32 %v182, 1.0614054
    %v189 = vmul.f32 %v184, 1.0614054
    %v190 = vmul.f32 %v186, 1.0614054
    %v191 = vadd.f32 %v187, -1.4531521
    %v192 = vadd.f32 %v188, -1.4531521
    %v193 = vadd.f32 %v189, -1.4531521
    %v194 = vadd.f32 %v190, -1.4531521
    %v195 = vmul.f32 %v191, %v180
    %v196 = vmul.f32 %v192, %v182
    %v197 = vmul.f32 %v193, %v184
    %v198 = vmul.f32 %v194, %v186
    %v199 = vadd.f32 %v195, 1.4214138
    %v200 = vadd.f32 %v196, 1.4214138
    %v201 = vadd.f32 %v197, 1.4214138
    %v202 = vadd.f32 %v198, 1.4214138
    %v203 = vmul.f32 %v199, %v180
    %v204 = vmul.f32 %v200, %v182
    %v205 = vmul.f32 %v201, %v184
    %v206 = vmul.f32 %v202, %v186
    %v207 = vadd.f32 %v203, -0.28449672
    %v208 = vadd.f32 %v204, -0.28449672
    %v209 = vadd.f32 %v205, -0.28449672
    %v210 = vadd.f32 %v206, -0.28449672
    %v211 = vmul.f32 %v207, %v180
    %v212 = vmul.f32 %v208, %v182
    %v213 = vmul.f32 %v209, %v184
    %v214 = vmul.f32 %v210, %v186
    %v215 = vadd.f32 %v211, 0.2548296
    %v216 = vadd.f32 %v212, 0.2548296
    %v217 = vadd.f32 %v213, 0.2548296
    %v218 = vadd.f32 %v214, 0.2548296
    %v219 = vmul.f32 %v215, %v180
    %v220 = vmul.f32 %v216, %v182
    %v221 = vmul.f32 %v217, %v184
    %v222 = vmul.f32 %v218, %v186
    %v223 = vsub.f32 0.0, %v167
    %v224 = vsub.f32 0.0, %v168
    %v225 = vsub.f32 0.0, %v169
    %v226 = vsub.f32 0.0, %v170
    %v227 = vmul.f32 %v223, %v167
    %v228 = vmul.f32 %v224, %v168
    %v229 = vmul.f32 %v225, %v169
    %v230 = vmul.f32 %v226, %v170
    %v231 = vmul.f32 %v227, 1.442695
    %v232 = vpow.pop %v231
    %v233 = vmul.f32 %v228, 1.442695
    %v234 = vpow.pop %v233
    %v235 = vmul.f32 %v229, 1.442695
    %v236 = vpow.pop %v235
    %v237 = vmul.f32 %v230, 1.442695
    %v238 = vpow.pop %v237
    %v239 = vmul.f32 %v219, %v232
    %v240 = vmul.f32 %v220, %v234
    %v241 = vmul.f32 %v221, %v236
    %v242 = vmul.f32 %v222, %v238
    %v243 = vsub.f32 1.0, %v239
    %v244 = vsub.f32 1.0, %v240
    %v245 = vsub.f32 1.0, %v241
    %v246 = vsub.f32 1.0, %v242
    %vm247 = vcmp.ge.f32.partialorder %v163, 0.0
    %vm248 = vcmp.ge.f32.partialorder %v164, 0.0
    %vm249 = vcmp.ge.f32.partialorder %v165, 0.0
    %vm250 = vcmp.ge.f32.partialorder %v166, 0.0
    %v251 = vsub.f32 0.0, %v243
    %v252 = vsub.f32 0.0, %v244
    %v253 = vsub.f32 0.0, %v245
    %v254 = vsub.f32 0.0, %v246
    %v255 = vsel %vm247, %v243, %v251
    %v256 = vsel %vm248, %v244, %v252
    %v257 = vsel %vm249, %v245, %v253
    %v258 = vsel %vm250, %v246, %v254
    %v259 = vadd.f32 %v255, 1.0
    %v260 = vadd.f32 %v256, 1.0
    %v261 = vadd.f32 %v257, 1.0
    %v262 = vadd.f32 %v258, 1.0
    %v263 = vmul.f32 %v159, %v259
    %v264 = vmul.f32 %v160, %v260
    %v265 = vmul.f32 %v161, %v261
    %v266 = vmul.f32 %v162, %v262
    %v267 = vld [vmem:[#allocation2 + $0x10] sm:$0xf]
    %v268 = vld [vmem:[#allocation2 + $0x14] sm:$0xf]
    %v269 = vpack.c.bf16 %v264, %v263
    %v270 = vpack.c.bf16 %v266, %v265
    %v273 = vunpack.c.l.b16 %v267
    %v274 = vunpack.c.l.b16 %v268
    %v275 = vpack.c.b16 %v274, %v273
    %276 = vrot.lane.b32.xlu0 %v275, 64
    %v277 = vpop.permute.xlu0 %276
    %v280 = vsel %vm33, %v269, 0
    %v283 = vsel %vm33, %v270, 0
    %285 = vmatprep.subr.bf16.mxu0 0
    %286 = vmatpush1.bf16.msra.mxu0 0
    %287 = vmatprep.subr.bf16.mxu0 0
    %288 = vmatpush1.bf16.msra.mxu0 0
    %289 = vmatprep.subr.bf16.mxu0 0
    %290 = vmatpush1.bf16.msra.mxu0 0
    %291 = vmatprep.subr.bf16.mxu0 0
    %292 = vmatpush1.bf16.msra.mxu0 0
    %293 = vmatprep.subr.bf16.mxu0 0
    %294 = vmatpush1.bf16.msra.mxu0 0
    %295 = vmatprep.subr.bf16.mxu0 0
    %296 = vmatpush1.bf16.msra.mxu0 0
    %297 = vmatprep.subr.bf16.mxu0 0
    %298 = vmatpush1.bf16.msra.mxu0 0
    %299 = vmatprep.subr.bf16.mxu0 0
    %300 = vmatpush1.bf16.msra.mxu0 %v277
    %301 = vmatprep.subr.bf16.mxu0 0
    %302 = vmatpush2.bf16.msra.mxu0 0
    %303 = vmatprep.subr.bf16.mxu0 0
    %304 = vmatpush2.bf16.msra.mxu0 0
    %305 = vmatprep.subr.bf16.mxu0 0
    %306 = vmatpush2.bf16.msra.mxu0 0
    %307 = vmatprep.subr.bf16.mxu0 0
    %308 = vmatpush2.bf16.msra.mxu0 0
    %309 = vmatprep.subr.bf16.mxu0 0
    %310 = vmatpush2.bf16.msra.mxu0 0
    %311 = vmatprep.subr.bf16.mxu0 0
    %312 = vmatpush2.bf16.msra.mxu0 0
    %313 = vmatprep.subr.bf16.mxu0 0
    %314 = vmatpush2.bf16.msra.mxu0 0
    %315 = vmatprep.subr.bf16.mxu0 0
    %316 = vmatpush2.bf16.msra.mxu0 0
    %317 = vmatprep.mubr.bf16.mxu0 0
    %318 = vmatmul.mubr.bf16.gmra.mxu0 %v280
    %v319 = vpop.f32.mrf.mxu0
    %v320 = vadd.f32 0.0, %v319
    %v321 = vpop.f32.mrf.mxu0
    %v322 = vpop.f32.mrf.mxu0
    %v323 = vadd.f32 0.0, %v322
    %v324 = vpop.f32.mrf.mxu0
    %325 = vmatprep.mubr.bf16.mxu0 0
    %326 = vmatmul.mubr.bf16.gmra.mxu0 %v283
    %v327 = vpop.f32.mrf.mxu0
    %v328 = vadd.f32 0.0, %v327
    %v329 = vpop.f32.mrf.mxu0
    %v330 = vpop.f32.mrf.mxu0
    %v331 = vadd.f32 0.0, %v330
    %v332 = vpop.f32.mrf.mxu0
    %333 = vdwg.mxu0
    %v334 = vpack.c.bf16 %v323, %v320
    %v335 = vpack.c.bf16 %v331, %v328
    %v336 = vld [vmem:[%s2] sm:$0xff]
    %v337 = vld [vmem:[%s2 + $0x8] sm:$0xff]
    %v338 = vld [vmem:[#allocation2] sm:$0xf]
    %v339 = vld [vmem:[#allocation2 + $0x4] sm:$0xf]
    %v342 = vunpack.c.l.b16 %v338
    %v343 = vunpack.c.l.b16 %v339
    %v344 = vpack.c.b16 %v343, %v342
    %vm345 = vcmask 261120
    %v347 = vsel %vm345, %v344, 0
    %349 = vmatprep.subr.bf16.mxu0 0
    %350 = vmatpush1.bf16.msra.mxu0 0
    %351 = vmatprep.subr.bf16.mxu0 0
    %352 = vmatpush1.bf16.msra.mxu0 0
    %353 = vmatprep.subr.bf16.mxu0 0
    %354 = vmatpush1.bf16.msra.mxu0 0
    %355 = vmatprep.subr.bf16.mxu0 0
    %356 = vmatpush1.bf16.msra.mxu0 0
    %357 = vmatprep.subr.bf16.mxu0 0
    %358 = vmatpush1.bf16.msra.mxu0 0
    %359 = vmatprep.subr.bf16.mxu0 0
    %360 = vmatpush1.bf16.msra.mxu0 0
    %361 = vmatprep.subr.bf16.mxu0 0
    %362 = vmatpush1.bf16.msra.mxu0 %v335
    %363 = vmatprep.subr.bf16.mxu0 0
    %364 = vmatpush1.bf16.msra.mxu0 %v334
    %365 = vmatprep.subr.bf16.mxu0 0
    %366 = vmatpush2.bf16.msra.mxu0 0
    %367 = vmatprep.subr.bf16.mxu0 0
    %368 = vmatpush2.bf16.msra.mxu0 0
    %369 = vmatprep.subr.bf16.mxu0 0
    %370 = vmatpush2.bf16.msra.mxu0 0
    %371 = vmatprep.subr.bf16.mxu0 0
    %372 = vmatpush2.bf16.msra.mxu0 0
    %373 = vmatprep.subr.bf16.mxu0 0
    %374 = vmatpush2.bf16.msra.mxu0 0
    %375 = vmatprep.subr.bf16.mxu0 0
    %376 = vmatpush2.bf16.msra.mxu0 0
    %377 = vmatprep.subr.bf16.mxu0 0
    %378 = vmatpush2.bf16.msra.mxu0 0
    %379 = vmatprep.subr.bf16.mxu0 0
    %380 = vmatpush2.bf16.msra.mxu0 0
    %381 = vmatprep.mubr.bf16.mxu0 0
    %382 = vmatmul.mubr.bf16.gmra.mxu0 %v347
    %v383 = vpop.f32.mrf.mxu0
    %v384 = vadd.f32 0.0, %v383
    %v385 = vpop.f32.mrf.mxu0
    %v386 = vpop.f32.mrf.mxu0
    %v387 = vadd.f32 0.0, %v386
    %v388 = vpop.f32.mrf.mxu0
    %389 = vdwg.mxu0
    %391 = vset.pattern.permute.xlu0 16
    %392 = vperm.xlu0 %391, %v336
    %v393 = vpop.permute.xlu0 %392
    %396 = vset.pattern.permute.xlu0 16
    %397 = vperm.xlu0 %396, %v337
    %v398 = vpop.permute.xlu0 %397
    %v400 = vadd.f32 %v393, %v384
    %v401 = vadd.f32 %v398, %v387
    %402 = vrot.lane.b32.xlu0 %v344, 96
    %v403 = vpop.permute.xlu0 %402
    %406 = vrot.lane.b32.xlu0 %v334, 124
    %v407 = vpop.permute.xlu0 %406
    %408 = vrot.lane.b32.xlu0 %v335, 124
    %v409 = vpop.permute.xlu0 %408
    %v413 = vsel %vm345, %v403, 0
    %415 = vmatprep.subr.bf16.mxu0 0
    %416 = vmatpush1.bf16.msra.mxu0 0
    %417 = vmatprep.subr.bf16.mxu0 0
    %418 = vmatpush1.bf16.msra.mxu0 0
    %419 = vmatprep.subr.bf16.mxu0 0
    %420 = vmatpush1.bf16.msra.mxu0 0
    %421 = vmatprep.subr.bf16.mxu0 0
    %422 = vmatpush1.bf16.msra.mxu0 0
    %423 = vmatprep.subr.bf16.mxu0 0
    %424 = vmatpush1.bf16.msra.mxu0 0
    %425 = vmatprep.subr.bf16.mxu0 0
    %426 = vmatpush1.bf16.msra.mxu0 0
    %427 = vmatprep.subr.bf16.mxu0 0
    %428 = vmatpush1.bf16.msra.mxu0 %v409
    %429 = vmatprep.subr.bf16.mxu0 0
    %430 = vmatpush1.bf16.msra.mxu0 %v407
    %431 = vmatprep.subr.bf16.mxu0 0
    %432 = vmatpush2.bf16.msra.mxu0 0
    %433 = vmatprep.subr.bf16.mxu0 0
    %434 = vmatpush2.bf16.msra.mxu0 0
    %435 = vmatprep.subr.bf16.mxu0 0
    %436 = vmatpush2.bf16.msra.mxu0 0
    %437 = vmatprep.subr.bf16.mxu0 0
    %438 = vmatpush2.bf16.msra.mxu0 0
    %439 = vmatprep.subr.bf16.mxu0 0
    %440 = vmatpush2.bf16.msra.mxu0 0
    %441 = vmatprep.subr.bf16.mxu0 0
    %442 = vmatpush2.bf16.msra.mxu0 0
    %443 = vmatprep.subr.bf16.mxu0 0
    %444 = vmatpush2.bf16.msra.mxu0 0
    %445 = vmatprep.subr.bf16.mxu0 0
    %446 = vmatpush2.bf16.msra.mxu0 0
    %447 = vmatprep.mubr.bf16.mxu0 0
    %448 = vmatmul.mubr.bf16.gmra.mxu0 %v413
    %v449 = vpop.f32.mrf.mxu0
    %v450 = vadd.f32 0.0, %v449
    %v451 = vpop.f32.mrf.mxu0
    %v452 = vpop.f32.mrf.mxu0
    %v453 = vadd.f32 0.0, %v452
    %v454 = vpop.f32.mrf.mxu0
    %455 = vdwg.mxu0
    %v456 = vadd.f32 %v400, %v450
    %v457 = vadd.f32 %v401, %v453
    %458 = vrot.lane.b32.xlu0 %v344, 64
    %v459 = vpop.permute.xlu0 %458
    %460 = vrot.lane.b32.xlu0 %v334, 120
    %v461 = vpop.permute.xlu0 %460
    %462 = vrot.lane.b32.xlu0 %v335, 120
    %v463 = vpop.permute.xlu0 %462
    %v467 = vsel %vm345, %v459, 0
    %469 = vmatprep.subr.bf16.mxu0 0
    %470 = vmatpush1.bf16.msra.mxu0 0
    %471 = vmatprep.subr.bf16.mxu0 0
    %472 = vmatpush1.bf16.msra.mxu0 0
    %473 = vmatprep.subr.bf16.mxu0 0
    %474 = vmatpush1.bf16.msra.mxu0 0
    %475 = vmatprep.subr.bf16.mxu0 0
    %476 = vmatpush1.bf16.msra.mxu0 0
    %477 = vmatprep.subr.bf16.mxu0 0
    %478 = vmatpush1.bf16.msra.mxu0 0
    %479 = vmatprep.subr.bf16.mxu0 0
    %480 = vmatpush1.bf16.msra.mxu0 0
    %481 = vmatprep.subr.bf16.mxu0 0
    %482 = vmatpush1.bf16.msra.mxu0 %v463
    %483 = vmatprep.subr.bf16.mxu0 0
    %484 = vmatpush1.bf16.msra.mxu0 %v461
    %485 = vmatprep.subr.bf16.mxu0 0
    %486 = vmatpush2.bf16.msra.mxu0 0
    %487 = vmatprep.subr.bf16.mxu0 0
    %488 = vmatpush2.bf16.msra.mxu0 0
    %489 = vmatprep.subr.bf16.mxu0 0
    %490 = vmatpush2.bf16.msra.mxu0 0
    %491 = vmatprep.subr.bf16.mxu0 0
    %492 = vmatpush2.bf16.msra.mxu0 0
    %493 = vmatprep.subr.bf16.mxu0 0
    %494 = vmatpush2.bf16.msra.mxu0 0
    %495 = vmatprep.subr.bf16.mxu0 0
    %496 = vmatpush2.bf16.msra.mxu0 0
    %497 = vmatprep.subr.bf16.mxu0 0
    %498 = vmatpush2.bf16.msra.mxu0 0
    %499 = vmatprep.subr.bf16.mxu0 0
    %500 = vmatpush2.bf16.msra.mxu0 0
    %501 = vmatprep.mubr.bf16.mxu0 0
    %502 = vmatmul.mubr.bf16.gmra.mxu0 %v467
    %v503 = vpop.f32.mrf.mxu0
    %v504 = vadd.f32 0.0, %v503
    %v505 = vpop.f32.mrf.mxu0
    %v506 = vpop.f32.mrf.mxu0
    %v507 = vadd.f32 0.0, %v506
    %v508 = vpop.f32.mrf.mxu0
    %509 = vdwg.mxu0
    %v510 = vadd.f32 %v456, %v504
    %v511 = vadd.f32 %v457, %v507
    %512 = vrot.lane.b32.xlu0 %v344, 32
    %v513 = vpop.permute.xlu0 %512
    %514 = vrot.lane.b32.xlu0 %v334, 116
    %v515 = vpop.permute.xlu0 %514
    %516 = vrot.lane.b32.xlu0 %v335, 116
    %v517 = vpop.permute.xlu0 %516
    %v521 = vsel %vm345, %v513, 0
    %523 = vmatprep.subr.bf16.mxu0 0
    %524 = vmatpush1.bf16.msra.mxu0 0
    %525 = vmatprep.subr.bf16.mxu0 0
    %526 = vmatpush1.bf16.msra.mxu0 0
    %527 = vmatprep.subr.bf16.mxu0 0
    %528 = vmatpush1.bf16.msra.mxu0 0
    %529 = vmatprep.subr.bf16.mxu0 0
    %530 = vmatpush1.bf16.msra.mxu0 0
    %531 = vmatprep.subr.bf16.mxu0 0
    %532 = vmatpush1.bf16.msra.mxu0 0
    %533 = vmatprep.subr.bf16.mxu0 0
    %534 = vmatpush1.bf16.msra.mxu0 0
    %535 = vmatprep.subr.bf16.mxu0 0
    %536 = vmatpush1.bf16.msra.mxu0 %v517
    %537 = vmatprep.subr.bf16.mxu0 0
    %538 = vmatpush1.bf16.msra.mxu0 %v515
    %539 = vmatprep.subr.bf16.mxu0 0
    %540 = vmatpush2.bf16.msra.mxu0 0
    %541 = vmatprep.subr.bf16.mxu0 0
    %542 = vmatpush2.bf16.msra.mxu0 0
    %543 = vmatprep.subr.bf16.mxu0 0
    %544 = vmatpush2.bf16.msra.mxu0 0
    %545 = vmatprep.subr.bf16.mxu0 0
    %546 = vmatpush2.bf16.msra.mxu0 0
    %547 = vmatprep.subr.bf16.mxu0 0
    %548 = vmatpush2.bf16.msra.mxu0 0
    %549 = vmatprep.subr.bf16.mxu0 0
    %550 = vmatpush2.bf16.msra.mxu0 0
    %551 = vmatprep.subr.bf16.mxu0 0
    %552 = vmatpush2.bf16.msra.mxu0 0
    %553 = vmatprep.subr.bf16.mxu0 0
    %554 = vmatpush2.bf16.msra.mxu0 0
    %555 = vmatprep.mubr.bf16.mxu0 0
    %556 = vmatmul.mubr.bf16.gmra.mxu0 %v521
    %v557 = vpop.f32.mrf.mxu0
    %v558 = vadd.f32 0.0, %v557
    %v559 = vpop.f32.mrf.mxu0
    %v560 = vpop.f32.mrf.mxu0
    %v561 = vadd.f32 0.0, %v560
    %v562 = vpop.f32.mrf.mxu0
    %563 = vdwg.mxu0
    %v564 = vadd.f32 %v510, %v558
    %v565 = vadd.f32 %v511, %v561
    %v566 = vmul.f32 %v564, 0.5
    %v567 = vmul.f32 %v565, 0.5
    %v568 = vmul.f32 %v564, 0.70710677
    %v569 = vmul.f32 %v565, 0.70710677
    %v570 = vand.u32 2147483647, %v568
    %v571 = vand.u32 2147483647, %v569
    %v572 = vmul.f32 %v570, 0.3275911
    %v573 = vmul.f32 %v571, 0.3275911
    %v574 = vadd.f32 %v572, 1.0
    %v575 = vadd.f32 %v573, 1.0
    %v576 = vrcp.pop %v574
    %v577 = vmul.f32 1.0, %v576
    %v578 = vrcp.pop %v575
    %v579 = vmul.f32 1.0, %v578
    %v580 = vmul.f32 %v577, 1.0614054
    %v581 = vmul.f32 %v579, 1.0614054
    %v582 = vadd.f32 %v580, -1.4531521
    %v583 = vadd.f32 %v581, -1.4531521
    %v584 = vmul.f32 %v582, %v577
    %v585 = vmul.f32 %v583, %v579
    %v586 = vadd.f32 %v584, 1.4214138
    %v587 = vadd.f32 %v585, 1.4214138
    %v588 = vmul.f32 %v586, %v577
    %v589 = vmul.f32 %v587, %v579
    %v590 = vadd.f32 %v588, -0.28449672
    %v591 = vadd.f32 %v589, -0.28449672
    %v592 = vmul.f32 %v590, %v577
    %v593 = vmul.f32 %v591, %v579
    %v594 = vadd.f32 %v592, 0.2548296
    %v595 = vadd.f32 %v593, 0.2548296
    %v596 = vmul.f32 %v594, %v577
    %v597 = vmul.f32 %v595, %v579
    %v598 = vsub.f32 0.0, %v570
    %v599 = vsub.f32 0.0, %v571
    %v600 = vmul.f32 %v598, %v570
    %v601 = vmul.f32 %v599, %v571
    %v602 = vmul.f32 %v600, 1.442695
    %v603 = vpow.pop %v602
    %v604 = vmul.f32 %v601, 1.442695
    %v605 = vpow.pop %v604
    %v606 = vmul.f32 %v596, %v603
    %v607 = vmul.f32 %v597, %v605
    %v608 = vsub.f32 1.0, %v606
    %v609 = vsub.f32 1.0, %v607
    %vm610 = vcmp.ge.f32.partialorder %v568, 0.0
    %vm611 = vcmp.ge.f32.partialorder %v569, 0.0
    %v612 = vsub.f32 0.0, %v608
    %v613 = vsub.f32 0.0, %v609
    %v614 = vsel %vm610, %v608, %v612
    %v615 = vsel %vm611, %v609, %v613
    %v616 = vadd.f32 %v614, 1.0
    %v617 = vadd.f32 %v615, 1.0
    %v618 = vmul.f32 %v566, %v616
    %v619 = vmul.f32 %v567, %v617
    %v620 = vld [vmem:[#allocation2 + $0x10] sm:$0x3]
    %v621 = vpack.c.bf16 %v619, %v618
    %v623 = vunpack.c.l.b16 %v620
    %v624 = vpack.c.b16 %v623, %v623
    %625 = vrot.lane.b32.xlu0 %v624, 48
    %v626 = vpop.permute.xlu0 %625
    %vm627 = vcmask 31744
    %v629 = vsel %vm627, %v621, 0
    %vm631 = vcmask 1041408
    %v633 = vsel %vm631, %v626, 0
    %635 = vmatprep.subr.bf16.mxu0 0
    %636 = vmatpush1.bf16.msra.mxu0 0
    %637 = vmatprep.subr.bf16.mxu0 0
    %638 = vmatpush1.bf16.msra.mxu0 0
    %639 = vmatprep.subr.bf16.mxu0 0
    %640 = vmatpush1.bf16.msra.mxu0 0
    %641 = vmatprep.subr.bf16.mxu0 0
    %642 = vmatpush1.bf16.msra.mxu0 0
    %643 = vmatprep.subr.bf16.mxu0 0
    %644 = vmatpush1.bf16.msra.mxu0 0
    %645 = vmatprep.subr.bf16.mxu0 0
    %646 = vmatpush1.bf16.msra.mxu0 0
    %647 = vmatprep.subr.bf16.mxu0 0
    %648 = vmatpush1.bf16.msra.mxu0 0
    %649 = vmatprep.subr.bf16.mxu0 0
    %650 = vmatpush1.bf16.msra.mxu0 %v633
    %651 = vmatprep.subr.bf16.mxu0 0
    %652 = vmatpush2.bf16.msra.mxu0 0
    %653 = vmatprep.subr.bf16.mxu0 0
    %654 = vmatpush2.bf16.msra.mxu0 0
    %655 = vmatprep.subr.bf16.mxu0 0
    %656 = vmatpush2.bf16.msra.mxu0 0
    %657 = vmatprep.subr.bf16.mxu0 0
    %658 = vmatpush2.bf16.msra.mxu0 0
    %659 = vmatprep.subr.bf16.mxu0 0
    %660 = vmatpush2.bf16.msra.mxu0 0
    %661 = vmatprep.subr.bf16.mxu0 0
    %662 = vmatpush2.bf16.msra.mxu0 0
    %663 = vmatprep.subr.bf16.mxu0 0
    %664 = vmatpush2.bf16.msra.mxu0 0
    %665 = vmatprep.subr.bf16.mxu0 0
    %666 = vmatpush2.bf16.msra.mxu0 0
    %667 = vmatprep.mubr.bf16.mxu0 0
    %668 = vmatmul.mubr.bf16.gmra.mxu0 %v629
    %v669 = vpop.f32.mrf.mxu0
    %v670 = vadd.f32 0.0, %v669
    %v671 = vpop.f32.mrf.mxu0
    %v672 = vpop.f32.mrf.mxu0
    %v673 = vadd.f32 0.0, %v672
    %v674 = vpop.f32.mrf.mxu0
    %675 = vdwg.mxu0
    %v676 = vld [vmem:[%s2] sm:$0xff]
    %v677 = vld [vmem:[%s2 + $0x8] sm:$0xff]
    %v678 = vld [vmem:[%s2 + $0x10] sm:$0xff]
    %v679 = vld [vmem:[%s2 + $0x18] sm:$0xff]
    %v680 = vld [vmem:[%s2 + $0x4] sm:$0x1]
    %v681 = vld [vmem:[#allocation2 + $0x8] sm:$0xf]
    %v682 = vld [vmem:[#allocation2 + $0xc] sm:$0xf]
    %v683 = vlaneseq
    %v684 = vshrl.u32 %v683, 7
    %v685 = vsub.s32 0, %v684
    %v686 = vrot.slane %v680, %v685
    %v687 = vmul.f32 %v670, %v686
    %v688 = vmul.f32 %v673, %v686
    %v689 = vpack.c.bf16 %v688, %v687
    %v692 = vunpack.c.l.b16 %v681
    %v693 = vunpack.c.l.b16 %v682
    %v694 = vpack.c.b16 %v693, %v692
    %v696 = vsel %vm33, %v694, 0
    %v699 = vsel %vm33, %v275, 0
    %701 = vmatprep.subr.bf16.mxu0 0
    %702 = vmatpush1.bf16.msra.mxu0 0
    %703 = vmatprep.subr.bf16.mxu0 0
    %704 = vmatpush1.bf16.msra.mxu0 0
    %705 = vmatprep.subr.bf16.mxu0 0
    %706 = vmatpush1.bf16.msra.mxu0 0
    %707 = vmatprep.subr.bf16.mxu0 0
    %708 = vmatpush1.bf16.msra.mxu0 0
    %709 = vmatprep.subr.bf16.mxu0 0
    %710 = vmatpush1.bf16.msra.mxu0 0
    %711 = vmatprep.subr.bf16.mxu0 0
    %712 = vmatpush1.bf16.msra.mxu0 0
    %713 = vmatprep.subr.bf16.mxu0 0
    %714 = vmatpush1.bf16.msra.mxu0 0
    %715 = vmatprep.subr.bf16.mxu0 0
    %716 = vmatpush1.bf16.msra.mxu0 %v689
    %717 = vmatprep.subr.bf16.mxu0 0
    %718 = vmatpush2.bf16.msra.mxu0 0
    %719 = vmatprep.subr.bf16.mxu0 0
    %720 = vmatpush2.bf16.msra.mxu0 0
    %721 = vmatprep.subr.bf16.mxu0 0
    %722 = vmatpush2.bf16.msra.mxu0 0
    %723 = vmatprep.subr.bf16.mxu0 0
    %724 = vmatpush2.bf16.msra.mxu0 0
    %725 = vmatprep.subr.bf16.mxu0 0
    %726 = vmatpush2.bf16.msra.mxu0 0
    %727 = vmatprep.subr.bf16.mxu0 0
    %728 = vmatpush2.bf16.msra.mxu0 0
    %729 = vmatprep.subr.bf16.mxu0 0
    %730 = vmatpush2.bf16.msra.mxu0 0
    %731 = vmatprep.subr.bf16.mxu0 0
    %732 = vmatpush2.bf16.msra.mxu0 0
    %733 = vmatprep.mubr.bf16.mxu0 0
    %734 = vmatmul.mubr.bf16.gmra.mxu0 %v696
    %v735 = vpop.f32.mrf.mxu0
    %v736 = vadd.f32 0.0, %v735
    %v737 = vpop.f32.mrf.mxu0
    %v738 = vpop.f32.mrf.mxu0
    %v739 = vadd.f32 0.0, %v738
    %v740 = vpop.f32.mrf.mxu0
    %741 = vmatprep.mubr.bf16.mxu0 0
    %742 = vmatmul.mubr.bf16.gmra.mxu0 %v699
    %v743 = vpop.f32.mrf.mxu0
    %v744 = vadd.f32 0.0, %v743
    %v745 = vpop.f32.mrf.mxu0
    %v746 = vpop.f32.mrf.mxu0
    %v747 = vadd.f32 0.0, %v746
    %v748 = vpop.f32.mrf.mxu0
    %749 = vdwg.mxu0
    %751 = vset.pattern.permute.xlu0 17
    %752 = vperm.xlu0 %751, %v676
    %v753 = vpop.permute.xlu0 %752
    %756 = vset.pattern.permute.xlu0 17
    %757 = vperm.xlu0 %756, %v677
    %v758 = vpop.permute.xlu0 %757
    %761 = vset.pattern.permute.xlu0 17
    %762 = vperm.xlu0 %761, %v678
    %v763 = vpop.permute.xlu0 %762
    %766 = vset.pattern.permute.xlu0 17
    %767 = vperm.xlu0 %766, %v679
    %v768 = vpop.permute.xlu0 %767
    %v770 = vadd.f32 %v753, %v736
    %v771 = vadd.f32 %v758, %v739
    %v772 = vadd.f32 %v763, %v744
    %v773 = vadd.f32 %v768, %v747
    %v774 = vld [vmem:[%s2 + $0x5] sm:$0x1]
    %v775 = vlaneseq
    %v776 = vshrl.u32 %v775, 7
    %v777 = vsub.s32 0, %v776
    %v778 = vrot.slane %v774, %v777
    %v779 = vmul.f32 %v670, %v778
    %v780 = vmul.f32 %v673, %v778
    %v781 = vpack.c.bf16 %v780, %v779
    %782 = vrot.lane.b32.xlu0 %v694, 112
    %v783 = vpop.permute.xlu0 %782
    %784 = vrot.lane.b32.xlu0 %v275, 112
    %v785 = vpop.permute.xlu0 %784
    %v787 = vsel %vm33, %v783, 0
    %v790 = vsel %vm33, %v785, 0
    %792 = vmatprep.subr.bf16.mxu0 0
    %793 = vmatpush1.bf16.msra.mxu0 0
    %794 = vmatprep.subr.bf16.mxu0 0
    %795 = vmatpush1.bf16.msra.mxu0 0
    %796 = vmatprep.subr.bf16.mxu0 0
    %797 = vmatpush1.bf16.msra.mxu0 0
    %798 = vmatprep.subr.bf16.mxu0 0
    %799 = vmatpush1.bf16.msra.mxu0 0
    %800 = vmatprep.subr.bf16.mxu0 0
    %801 = vmatpush1.bf16.msra.mxu0 0
    %802 = vmatprep.subr.bf16.mxu0 0
    %803 = vmatpush1.bf16.msra.mxu0 0
    %804 = vmatprep.subr.bf16.mxu0 0
    %805 = vmatpush1.bf16.msra.mxu0 0
    %806 = vmatprep.subr.bf16.mxu0 0
    %807 = vmatpush1.bf16.msra.mxu0 %v781
    %808 = vmatprep.subr.bf16.mxu0 0
    %809 = vmatpush2.bf16.msra.mxu0 0
    %810 = vmatprep.subr.bf16.mxu0 0
    %811 = vmatpush2.bf16.msra.mxu0 0
    %812 = vmatprep.subr.bf16.mxu0 0
    %813 = vmatpush2.bf16.msra.mxu0 0
    %814 = vmatprep.subr.bf16.mxu0 0
    %815 = vmatpush2.bf16.msra.mxu0 0
    %816 = vmatprep.subr.bf16.mxu0 0
    %817 = vmatpush2.bf16.msra.mxu0 0
    %818 = vmatprep.subr.bf16.mxu0 0
    %819 = vmatpush2.bf16.msra.mxu0 0
    %820 = vmatprep.subr.bf16.mxu0 0
    %821 = vmatpush2.bf16.msra.mxu0 0
    %822 = vmatprep.subr.bf16.mxu0 0
    %823 = vmatpush2.bf16.msra.mxu0 0
    %824 = vmatprep.mubr.bf16.mxu0 0
    %825 = vmatmul.mubr.bf16.gmra.mxu0 %v787
    %v826 = vpop.f32.mrf.mxu0
    %v827 = vadd.f32 0.0, %v826
    %v828 = vpop.f32.mrf.mxu0
    %v829 = vpop.f32.mrf.mxu0
    %v830 = vadd.f32 0.0, %v829
    %v831 = vpop.f32.mrf.mxu0
    %832 = vmatprep.mubr.bf16.mxu0 0
    %833 = vmatmul.mubr.bf16.gmra.mxu0 %v790
    %v834 = vpop.f32.mrf.mxu0
    %v835 = vadd.f32 0.0, %v834
    %v836 = vpop.f32.mrf.mxu0
    %v837 = vpop.f32.mrf.mxu0
    %v838 = vadd.f32 0.0, %v837
    %v839 = vpop.f32.mrf.mxu0
    %840 = vdwg.mxu0
    %v841 = vadd.f32 %v770, %v827
    %v842 = vadd.f32 %v771, %v830
    %v843 = vadd.f32 %v772, %v835
    %v844 = vadd.f32 %v773, %v838
    %v845 = vld [vmem:[%s2 + $0x6] sm:$0x1]
    %v846 = vlaneseq
    %v847 = vshrl.u32 %v846, 7
    %v848 = vsub.s32 0, %v847
    %v849 = vrot.slane %v845, %v848
    %v850 = vmul.f32 %v670, %v849
    %v851 = vmul.f32 %v673, %v849
    %v852 = vpack.c.bf16 %v851, %v850
    %853 = vrot.lane.b32.xlu0 %v694, 96
    %v854 = vpop.permute.xlu0 %853
    %855 = vrot.lane.b32.xlu0 %v275, 96
    %v856 = vpop.permute.xlu0 %855
    %v858 = vsel %vm33, %v854, 0
    %v861 = vsel %vm33, %v856, 0
    %863 = vmatprep.subr.bf16.mxu0 0
    %864 = vmatpush1.bf16.msra.mxu0 0
    %865 = vmatprep.subr.bf16.mxu0 0
    %866 = vmatpush1.bf16.msra.mxu0 0
    %867 = vmatprep.subr.bf16.mxu0 0
    %868 = vmatpush1.bf16.msra.mxu0 0
    %869 = vmatprep.subr.bf16.mxu0 0
    %870 = vmatpush1.bf16.msra.mxu0 0
    %871 = vmatprep.subr.bf16.mxu0 0
    %872 = vmatpush1.bf16.msra.mxu0 0
    %873 = vmatprep.subr.bf16.mxu0 0
    %874 = vmatpush1.bf16.msra.mxu0 0
    %875 = vmatprep.subr.bf16.mxu0 0
    %876 = vmatpush1.bf16.msra.mxu0 0
    %877 = vmatprep.subr.bf16.mxu0 0
    %878 = vmatpush1.bf16.msra.mxu0 %v852
    %879 = vmatprep.subr.bf16.mxu0 0
    %880 = vmatpush2.bf16.msra.mxu0 0
    %881 = vmatprep.subr.bf16.mxu0 0
    %882 = vmatpush2.bf16.msra.mxu0 0
    %883 = vmatprep.subr.bf16.mxu0 0
    %884 = vmatpush2.bf16.msra.mxu0 0
    %885 = vmatprep.subr.bf16.mxu0 0
    %886 = vmatpush2.bf16.msra.mxu0 0
    %887 = vmatprep.subr.bf16.mxu0 0
    %888 = vmatpush2.bf16.msra.mxu0 0
    %889 = vmatprep.subr.bf16.mxu0 0
    %890 = vmatpush2.bf16.msra.mxu0 0
    %891 = vmatprep.subr.bf16.mxu0 0
    %892 = vmatpush2.bf16.msra.mxu0 0
    %893 = vmatprep.subr.bf16.mxu0 0
    %894 = vmatpush2.bf16.msra.mxu0 0
    %895 = vmatprep.mubr.bf16.mxu0 0
    %896 = vmatmul.mubr.bf16.gmra.mxu0 %v858
    %v897 = vpop.f32.mrf.mxu0
    %v898 = vadd.f32 0.0, %v897
    %v899 = vpop.f32.mrf.mxu0
    %v900 = vpop.f32.mrf.mxu0
    %v901 = vadd.f32 0.0, %v900
    %v902 = vpop.f32.mrf.mxu0
    %903 = vmatprep.mubr.bf16.mxu0 0
    %904 = vmatmul.mubr.bf16.gmra.mxu0 %v861
    %v905 = vpop.f32.mrf.mxu0
    %v906 = vadd.f32 0.0, %v905
    %v907 = vpop.f32.mrf.mxu0
    %v908 = vpop.f32.mrf.mxu0
    %v909 = vadd.f32 0.0, %v908
    %v910 = vpop.f32.mrf.mxu0
    %911 = vdwg.mxu0
    %v912 = vadd.f32 %v841, %v898
    %v913 = vadd.f32 %v842, %v901
    %v914 = vadd.f32 %v843, %v906
    %v915 = vadd.f32 %v844, %v909
    %v916 = vld [vmem:[%s2 + $0x7] sm:$0x1]
    %v917 = vlaneseq
    %v918 = vshrl.u32 %v917, 7
    %v919 = vsub.s32 0, %v918
    %v920 = vrot.slane %v916, %v919
    %v921 = vmul.f32 %v670, %v920
    %v922 = vmul.f32 %v673, %v920
    %v923 = vpack.c.bf16 %v922, %v921
    %924 = vrot.lane.b32.xlu0 %v694, 80
    %v925 = vpop.permute.xlu0 %924
    %926 = vrot.lane.b32.xlu0 %v275, 80
    %v927 = vpop.permute.xlu0 %926
    %v929 = vsel %vm33, %v925, 0
    %v932 = vsel %vm33, %v927, 0
    %934 = vmatprep.subr.bf16.mxu0 0
    %935 = vmatpush1.bf16.msra.mxu0 0
    %936 = vmatprep.subr.bf16.mxu0 0
    %937 = vmatpush1.bf16.msra.mxu0 0
    %938 = vmatprep.subr.bf16.mxu0 0
    %939 = vmatpush1.bf16.msra.mxu0 0
    %940 = vmatprep.subr.bf16.mxu0 0
    %941 = vmatpush1.bf16.msra.mxu0 0
    %942 = vmatprep.subr.bf16.mxu0 0
    %943 = vmatpush1.bf16.msra.mxu0 0
    %944 = vmatprep.subr.bf16.mxu0 0
    %945 = vmatpush1.bf16.msra.mxu0 0
    %946 = vmatprep.subr.bf16.mxu0 0
    %947 = vmatpush1.bf16.msra.mxu0 0
    %948 = vmatprep.subr.bf16.mxu0 0
    %949 = vmatpush1.bf16.msra.mxu0 %v923
    %950 = vmatprep.subr.bf16.mxu0 0
    %951 = vmatpush2.bf16.msra.mxu0 0
    %952 = vmatprep.subr.bf16.mxu0 0
    %953 = vmatpush2.bf16.msra.mxu0 0
    %954 = vmatprep.subr.bf16.mxu0 0
    %955 = vmatpush2.bf16.msra.mxu0 0
    %956 = vmatprep.subr.bf16.mxu0 0
    %957 = vmatpush2.bf16.msra.mxu0 0
    %958 = vmatprep.subr.bf16.mxu0 0
    %959 = vmatpush2.bf16.msra.mxu0 0
    %960 = vmatprep.subr.bf16.mxu0 0
    %961 = vmatpush2.bf16.msra.mxu0 0
    %962 = vmatprep.subr.bf16.mxu0 0
    %963 = vmatpush2.bf16.msra.mxu0 0
    %964 = vmatprep.subr.bf16.mxu0 0
    %965 = vmatpush2.bf16.msra.mxu0 0
    %966 = vmatprep.mubr.bf16.mxu0 0
    %967 = vmatmul.mubr.bf16.gmra.mxu0 %v929
    %v968 = vpop.f32.mrf.mxu0
    %v969 = vadd.f32 0.0, %v968
    %v970 = vpop.f32.mrf.mxu0
    %v971 = vpop.f32.mrf.mxu0
    %v972 = vadd.f32 0.0, %v971
    %v973 = vpop.f32.mrf.mxu0
    %974 = vmatprep.mubr.bf16.mxu0 0
    %975 = vmatmul.mubr.bf16.gmra.mxu0 %v932
    %v976 = vpop.f32.mrf.mxu0
    %v977 = vadd.f32 0.0, %v976
    %v978 = vpop.f32.mrf.mxu0
    %v979 = vpop.f32.mrf.mxu0
    %v980 = vadd.f32 0.0, %v979
    %v981 = vpop.f32.mrf.mxu0
    %982 = vdwg.mxu0
    %v983 = vadd.f32 %v912, %v969
    %v984 = vadd.f32 %v913, %v972
    %v985 = vadd.f32 %v914, %v977
    %v986 = vadd.f32 %v915, %v980
    %v987 = vadd.f32 %v263, %v983
    %v988 = vadd.f32 %v264, %v984
    %v989 = vadd.f32 %v265, %v985
    %v990 = vadd.f32 %v266, %v986
    %v991 = vpack.c.bf16 %v988, %v987
    %v992 = vpack.c.bf16 %v990, %v989
    %v993 = vld [vmem:[%s2 + $0x1] sm:$0x1]
    %v994 = vlaneseq
    %v995 = vshrl.u32 %v994, 7
    %v996 = vsub.s32 0, %v995
    %v997 = vrot.slane %v993, %v996
    %998 = vrot.lane.b32.xlu0 %v100, 48
    %v999 = vpop.permute.xlu0 %998
    %v1002 = vsel %vm33, %v991, 0
    %v1005 = vsel %vm33, %v992, 0
    %1007 = vmatprep.subr.bf16.mxu0 0
    %1008 = vmatpush1.bf16.msra.mxu0 0
    %1009 = vmatprep.subr.bf16.mxu0 0
    %1010 = vmatpush1.bf16.msra.mxu0 0
    %1011 = vmatprep.subr.bf16.mxu0 0
    %1012 = vmatpush1.bf16.msra.mxu0 0
    %1013 = vmatprep.subr.bf16.mxu0 0
    %1014 = vmatpush1.bf16.msra.mxu0 0
    %1015 = vmatprep.subr.bf16.mxu0 0
    %1016 = vmatpush1.bf16.msra.mxu0 0
    %1017 = vmatprep.subr.bf16.mxu0 0
    %1018 = vmatpush1.bf16.msra.mxu0 0
    %1019 = vmatprep.subr.bf16.mxu0 0
    %1020 = vmatpush1.bf16.msra.mxu0 0
    %1021 = vmatprep.subr.bf16.mxu0 0
    %1022 = vmatpush1.bf16.msra.mxu0 %v999
    %1023 = vmatprep.subr.bf16.mxu0 0
    %1024 = vmatpush2.bf16.msra.mxu0 0
    %1025 = vmatprep.subr.bf16.mxu0 0
    %1026 = vmatpush2.bf16.msra.mxu0 0
    %1027 = vmatprep.subr.bf16.mxu0 0
    %1028 = vmatpush2.bf16.msra.mxu0 0
    %1029 = vmatprep.subr.bf16.mxu0 0
    %1030 = vmatpush2.bf16.msra.mxu0 0
    %1031 = vmatprep.subr.bf16.mxu0 0
    %1032 = vmatpush2.bf16.msra.mxu0 0
    %1033 = vmatprep.subr.bf16.mxu0 0
    %1034 = vmatpush2.bf16.msra.mxu0 0
    %1035 = vmatprep.subr.bf16.mxu0 0
    %1036 = vmatpush2.bf16.msra.mxu0 0
    %1037 = vmatprep.subr.bf16.mxu0 0
    %1038 = vmatpush2.bf16.msra.mxu0 0
    %1039 = vmatprep.mubr.bf16.mxu0 0
    %1040 = vmatmul.mubr.bf16.gmra.mxu0 %v1002
    %v1041 = vpop.f32.mrf.mxu0
    %v1042 = vadd.f32 %v997, %v1041
    %v1043 = vpop.f32.mrf.mxu0
    %v1044 = vpop.f32.mrf.mxu0
    %v1045 = vadd.f32 %v997, %v1044
    %v1046 = vpop.f32.mrf.mxu0
    %1047 = vmatprep.mubr.bf16.mxu0 0
    %1048 = vmatmul.mubr.bf16.gmra.mxu0 %v1005
    %v1049 = vpop.f32.mrf.mxu0
    %v1050 = vadd.f32 %v997, %v1049
    %v1051 = vpop.f32.mrf.mxu0
    %v1052 = vpop.f32.mrf.mxu0
    %v1053 = vadd.f32 %v997, %v1052
    %v1054 = vpop.f32.mrf.mxu0
    %1055 = vdwg.mxu0
    %v1056 = vmul.f32 %v1042, 0.5
    %v1057 = vmul.f32 %v1045, 0.5
    %v1058 = vmul.f32 %v1050, 0.5
    %v1059 = vmul.f32 %v1053, 0.5
    %v1060 = vmul.f32 %v1042, 0.70710677
    %v1061 = vmul.f32 %v1045, 0.70710677
    %v1062 = vmul.f32 %v1050, 0.70710677
    %v1063 = vmul.f32 %v1053, 0.70710677
    %v1064 = vand.u32 2147483647, %v1060
    %v1065 = vand.u32 2147483647, %v1061
    %v1066 = vand.u32 2147483647, %v1062
    %v1067 = vand.u32 2147483647, %v1063
    %v1068 = vmul.f32 %v1064, 0.3275911
    %v1069 = vmul.f32 %v1065, 0.3275911
    %v1070 = vmul.f32 %v1066, 0.3275911
    %v1071 = vmul.f32 %v1067, 0.3275911
    %v1072 = vadd.f32 %v1068, 1.0
    %v1073 = vadd.f32 %v1069, 1.0
    %v1074 = vadd.f32 %v1070, 1.0
    %v1075 = vadd.f32 %v1071, 1.0
    %v1076 = vrcp.pop %v1072
    %v1077 = vmul.f32 1.0, %v1076
    %v1078 = vrcp.pop %v1073
    %v1079 = vmul.f32 1.0, %v1078
    %v1080 = vrcp.pop %v1074
    %v1081 = vmul.f32 1.0, %v1080
    %v1082 = vrcp.pop %v1075
    %v1083 = vmul.f32 1.0, %v1082
    %v1084 = vmul.f32 %v1077, 1.0614054
    %v1085 = vmul.f32 %v1079, 1.0614054
    %v1086 = vmul.f32 %v1081, 1.0614054
    %v1087 = vmul.f32 %v1083, 1.0614054
    %v1088 = vadd.f32 %v1084, -1.4531521
    %v1089 = vadd.f32 %v1085, -1.4531521
    %v1090 = vadd.f32 %v1086, -1.4531521
    %v1091 = vadd.f32 %v1087, -1.4531521
    %v1092 = vmul.f32 %v1088, %v1077
    %v1093 = vmul.f32 %v1089, %v1079
    %v1094 = vmul.f32 %v1090, %v1081
    %v1095 = vmul.f32 %v1091, %v1083
    %v1096 = vadd.f32 %v1092, 1.4214138
    %v1097 = vadd.f32 %v1093, 1.4214138
    %v1098 = vadd.f32 %v1094, 1.4214138
    %v1099 = vadd.f32 %v1095, 1.4214138
    %v1100 = vmul.f32 %v1096, %v1077
    %v1101 = vmul.f32 %v1097, %v1079
    %v1102 = vmul.f32 %v1098, %v1081
    %v1103 = vmul.f32 %v1099, %v1083
    %v1104 = vadd.f32 %v1100, -0.28449672
    %v1105 = vadd.f32 %v1101, -0.28449672
    %v1106 = vadd.f32 %v1102, -0.28449672
    %v1107 = vadd.f32 %v1103, -0.28449672
    %v1108 = vmul.f32 %v1104, %v1077
    %v1109 = vmul.f32 %v1105, %v1079
    %v1110 = vmul.f32 %v1106, %v1081
    %v1111 = vmul.f32 %v1107, %v1083
    %v1112 = vadd.f32 %v1108, 0.2548296
    %v1113 = vadd.f32 %v1109, 0.2548296
    %v1114 = vadd.f32 %v1110, 0.2548296
    %v1115 = vadd.f32 %v1111, 0.2548296
    %v1116 = vmul.f32 %v1112, %v1077
    %v1117 = vmul.f32 %v1113, %v1079
    %v1118 = vmul.f32 %v1114, %v1081
    %v1119 = vmul.f32 %v1115, %v1083
    %v1120 = vsub.f32 0.0, %v1064
    %v1121 = vsub.f32 0.0, %v1065
    %v1122 = vsub.f32 0.0, %v1066
    %v1123 = vsub.f32 0.0, %v1067
    %v1124 = vmul.f32 %v1120, %v1064
    %v1125 = vmul.f32 %v1121, %v1065
    %v1126 = vmul.f32 %v1122, %v1066
    %v1127 = vmul.f32 %v1123, %v1067
    %v1128 = vmul.f32 %v1124, 1.442695
    %v1129 = vpow.pop %v1128
    %v1130 = vmul.f32 %v1125, 1.442695
    %v1131 = vpow.pop %v1130
    %v1132 = vmul.f32 %v1126, 1.442695
    %v1133 = vpow.pop %v1132
    %v1134 = vmul.f32 %v1127, 1.442695
    %v1135 = vpow.pop %v1134
    %v1136 = vmul.f32 %v1116, %v1129
    %v1137 = vmul.f32 %v1117, %v1131
    %v1138 = vmul.f32 %v1118, %v1133
    %v1139 = vmul.f32 %v1119, %v1135
    %v1140 = vsub.f32 1.0, %v1136
    %v1141 = vsub.f32 1.0, %v1137
    %v1142 = vsub.f32 1.0, %v1138
    %v1143 = vsub.f32 1.0, %v1139
    %vm1144 = vcmp.ge.f32.partialorder %v1060, 0.0
    %vm1145 = vcmp.ge.f32.partialorder %v1061, 0.0
    %vm1146 = vcmp.ge.f32.partialorder %v1062, 0.0
    %vm1147 = vcmp.ge.f32.partialorder %v1063, 0.0
    %v1148 = vsub.f32 0.0, %v1140
    %v1149 = vsub.f32 0.0, %v1141
    %v1150 = vsub.f32 0.0, %v1142
    %v1151 = vsub.f32 0.0, %v1143
    %v1152 = vsel %vm1144, %v1140, %v1148
    %v1153 = vsel %vm1145, %v1141, %v1149
    %v1154 = vsel %vm1146, %v1142, %v1150
    %v1155 = vsel %vm1147, %v1143, %v1151
    %v1156 = vadd.f32 %v1152, 1.0
    %v1157 = vadd.f32 %v1153, 1.0
    %v1158 = vadd.f32 %v1154, 1.0
    %v1159 = vadd.f32 %v1155, 1.0
    %v1160 = vmul.f32 %v1056, %v1156
    %v1161 = vmul.f32 %v1057, %v1157
    %v1162 = vmul.f32 %v1058, %v1158
    %v1163 = vmul.f32 %v1059, %v1159
    %1164 = vst.msk [vmem:[%s3] sm:$0xff] %vm33, %v1160
    %1165 = vst.msk [vmem:[%s3 + $0x8] sm:$0xff] %vm33, %v1161
    %1166 = vst.msk [vmem:[%s3 + $0x10] sm:$0xff] %vm33, %v1162
    %1167 = vst.msk [vmem:[%s3 + $0x18] sm:$0xff] %vm33, %v1163
    // Predicated region
    $region18: #{tpu_custom_call.1} parent=1 // pred_check
      _
    $region19: #{tpu_custom_call.1} parent=1 // pred_check_branch
      %1169 = sbr.rel (0) target = $region21
    $region20: #{tpu_custom_call.1} parent=1 // pred_region
      _
    $region21: #{tpu_custom_call.1} parent=1 // pred_fallthru
      _
    // Predicated region
    $region22: #{tpu_custom_call.1} parent=1 // pred_check
      _
    $region23: #{tpu_custom_call.1} parent=1 // pred_check_branch
      %1171 = sbr.rel (0) target = $region25
    $region24: #{tpu_custom_call.1} parent=1 // pred_region
      _
    $region25: #{tpu_custom_call.1} parent=1 // pred_fallthru
      _
    %1172 = vsyncpa [#allocation3], 1

</llo_original>
